<compile_context>
chip_gen: v7x
topology: tpu7x:2x2x1
jax: 0.10.0
libtpu: 0.0.40
codegen_flags: <defaults>
</compile_context>

<pallas_src>
import functools

import jax
import jax.numpy as jnp
from jax import lax
from jax.experimental import pallas as pl
from jax.experimental.pallas import tpu as pltpu

_LANE = 128
_SUBLANE = 8


def _round_up(v, m):
    return ((v + m - 1) // m) * m


def _largest_divisor_leq(n, cap):
    cap = max(1, min(int(n), int(cap)))
    for d in range(cap, 0, -1):
        if n % d == 0:
            return d
    return 1


def _detect_tpu():
    """Per-generation VMEM capacity / MXU row width (conservative fallback)."""
    kind = ""
    try:
        dev = jax.devices()[0]
        if dev.platform == "tpu":
            kind = dev.device_kind.lower()
    except Exception:
        pass
    if "v7" in kind:
        return {"vmem_bytes": 64 << 20, "mxu_rows": 256}
    if "v6" in kind:
        return {"vmem_bytes": 128 << 20, "mxu_rows": 256}
    if "v5" in kind:
        return {"vmem_bytes": 128 << 20, "mxu_rows": 128}
    return {"vmem_bytes": 64 << 20, "mxu_rows": 128}


def _plan_tiling(B, T, I, H, O, info, batch_block=None, time_chunk=None):
    """Choose (Bt, Tc, unroll, vmem_limit) from a per-generation VMEM budget."""
    aligned = (H % _LANE) == 0
    Hp = _round_up(H, _LANE)                            # padded hidden width
    G = 4 * H if aligned else _round_up(4 * H, _LANE)   # packed gate width
    Op = _round_up(O, _LANE)                            # lane-dense output width
    Ip = _round_up(I, _LANE)                            # x block is lane-padded in VMEM

    budget = info["vmem_bytes"] // 2                    # headroom for compiler scratch
    Bp0 = _round_up(B, _SUBLANE)

    if batch_block is not None:
        Bt = min(max(_SUBLANE, _round_up(int(batch_block), _SUBLANE)), Bp0)
    elif Bp0 <= _SUBLANE:
        Bt = Bp0
    else:
        # Fill the MXU rows (128 on v5e, 256 on v6e/v7x) but keep >= 2 grid
        # programs so the parallel batch axis can shard across v7x's 2 TCs.
        Bt = min(info["mxu_rows"], _round_up(-(-Bp0 // 2), _SUBLANE), Bp0)

    # Weights / biases, conservatively counted double-buffered.
    # TODO(synk): mark the grid-invariant weight specs pipeline_mode=pl.Buffered(1)
    # (single buffer) once verified on all targets; budgeted as 2x here.
    w_bytes = 4 * 2 * (_round_up(I, _SUBLANE) * G + Hp * G + _SUBLANE * G
                       + Hp * Op + _SUBLANE * Op)

    def _fixed_and_per_t(bt):
        fixed = w_bytes + 4 * (2 * bt * Hp + 2 * bt * Op)   # h/c scratch + out dbuf
        per_t = 4 * bt * (2 * Ip + G)                       # x dbuf + xproj scratch
        return fixed, per_t

    if batch_block is None:
        while True:
            fixed, per_t = _fixed_and_per_t(Bt)
            if budget - fixed >= per_t or Bt <= _SUBLANE:
                break
            Bt = max(_SUBLANE, _round_up(Bt // 2, _SUBLANE))

    fixed, per_t = _fixed_and_per_t(Bt)
    tc_cap = max(1, (budget - fixed) // per_t)

    if time_chunk is not None:
        Tc = _largest_divisor_leq(T, max(1, int(time_chunk)))
    else:
        Tc = _largest_divisor_leq(T, min(T, tc_cap))

    est_bytes = fixed + per_t * Tc
    vmem_limit = int(min(info["vmem_bytes"],
                         max(est_bytes + (8 << 20), 32 << 20)))

    # Gate unroll on per-step live state vs. the 256 KiB vreg file.
    step_bytes = 4 * Bt * G
    if step_bytes >= (128 << 10):
        unroll = 2
    elif step_bytes >= (64 << 10):
        unroll = 4
    else:
        unroll = 8
    if Tc <= unroll:
        unroll = True

    return dict(aligned=aligned, Hp=Hp, G=G, Op=Op, Bt=Bt, Tc=Tc,
                unroll=unroll, vmem_limit=vmem_limit)


def _tft_kernel(x_ref, wih_ref, whh_ref, b_ref, wc_ref, bc_ref, out_ref,
                xproj_ref, h_ref, c_ref, *,
                hidden, hidden_pad, gate_width, aligned, unroll):
    """One (batch tile, time chunk) grid step of the LSTM + classifier.

    x_ref    : (Tc, Bt, I)   time-major input chunk
    wih_ref  : (I,  G)       input->gates weight (packed i|f|g|o, zero padded)
    whh_ref  : (Hp, G)       hidden->gates weight (rows >= H are zero)
    b_ref    : (1,  G)       b_ih + b_hh (packed, zero padded)
    wc_ref   : (Hp, Op)      classifier weight (transposed, zero padded)
    bc_ref   : (1,  Op)
    out_ref  : (Bt, Op)      written on the last time chunk only
    xproj_ref: (Tc, Bt, G)   VMEM scratch: hoisted input projection of the chunk
    h_ref/c_ref: (Bt, Hp)    persistent recurrent state across time chunks
    """
    Tc, Bt, I = x_ref.shape
    H, Hp, G = hidden, hidden_pad, gate_width
    t_blk = pl.program_id(1)

    # (Re)initialize the recurrent state at the first time chunk of each tile.
    @pl.when(t_blk == 0)
    def _():
        h_ref[...] = jnp.zeros_like(h_ref)
        c_ref[...] = jnp.zeros_like(c_ref)

    # ---- hoisted input projection (no serial dependence; one MXU pass) ------
    x2d = x_ref[...].reshape(Tc * Bt, I)
    proj = jnp.dot(x2d, wih_ref[...], preferred_element_type=jnp.float32)
    xproj_ref[...] = (proj + b_ref[...]).reshape(Tc, Bt, G)

    whh = whh_ref[...]   # loaded once; recurrent matmul operand

    if not aligned:
        lane = lax.broadcasted_iota(jnp.int32, (Bt, G), 1)
        g_mask = (lane >= 2 * H) & (lane < 3 * H)      # tanh-gate lanes

    def step(t, carry):
        h, c = carry
        # Only the h @ W_hh matmul remains on the serial critical path.
        gates = xproj_ref[t] + jnp.dot(h, whh, preferred_element_type=jnp.float32)
        if aligned:
            # H % 128 == 0: per-gate slabs are lane-aligned slices.
            i_g = jax.nn.sigmoid(gates[:, 0 * Hp:1 * Hp])
            f_g = jax.nn.sigmoid(gates[:, 1 * Hp:2 * Hp])
            g_g = jnp.tanh(gates[:, 2 * Hp:3 * Hp])
            o_g = jax.nn.sigmoid(gates[:, 3 * Hp:4 * Hp])
        else:
            # Packed gates: one sigmoid pass + one tanh pass over the packed
            # width, then extract i/f/g/o with XLU rolls (overlaps the MXU).
            act = jnp.where(g_mask, jnp.tanh(gates), jax.nn.sigmoid(gates))

            def slab(k):
                if k == 0:
                    return act[:, :Hp]
                return pltpu.roll(act, shift=(G - k * H) % G, axis=1)[:, :Hp]

            i_g, f_g, g_g, o_g = slab(0), slab(1), slab(2), slab(3)
            # Lanes >= H of each slab hold wrapped (bounded) garbage; it only
            # ever multiplies zero rows of W_hh / W_cls, so it never reaches
            # the real outputs.
        c_new = f_g * c + i_g * g_g
        h_new = o_g * jnp.tanh(c_new)
        return (h_new, c_new)

    h_fin, c_fin = lax.fori_loop(0, Tc, step, (h_ref[...], c_ref[...]),
                                 unroll=unroll)
    h_ref[...] = h_fin
    c_ref[...] = c_fin

    # ---- classifier on the final hidden state (lane-dense output block) -----
    @pl.when(t_blk == pl.num_programs(1) - 1)
    def _():
        out_ref[...] = (
            jnp.dot(h_fin, wc_ref[...], preferred_element_type=jnp.float32)
            + bc_ref[...])


def temporal_fusion_transformer_forward(x, params, *, batch_block=None,
                                        time_chunk=None):
    """Matches TemporalFusionTransformer.forward.

    x: (B, T, input_size) float32, or (B, input_size) treated as T = 1.
    returns: (B, output_size) float32
    """
    if x.ndim == 2:
        x = x[:, None, :]
    B, T, I = x.shape

    w_ih = params["w_ih"]      # (4H, I)  PyTorch layout, gate order i|f|g|o
    w_hh = params["w_hh"]      # (4H, H)
    b_ih = params["b_ih"]      # (4H,)
    b_hh = params["b_hh"]      # (4H,)
    w_cls = params["w_cls"]    # (O, H)
    b_cls = params["b_cls"]    # (O,)

    H = w_hh.shape[1]
    O = w_cls.shape[0]
    FH = 4 * H

    plan = _plan_tiling(B, T, I, H, O, _detect_tpu(),
                        batch_block=batch_block, time_chunk=time_chunk)
    Hp, G, Op = plan["Hp"], plan["G"], plan["Op"]
    Bt, Tc = plan["Bt"], plan["Tc"]

    f32 = jnp.float32

    # ---- parameter re-layout: transpose, pack gates, zero-pad ---------------
    wih_p = jnp.zeros((I, G), f32).at[:, :FH].set(jnp.transpose(w_ih).astype(f32))
    whh_p = jnp.zeros((Hp, G), f32).at[:H, :FH].set(jnp.transpose(w_hh).astype(f32))
    b_p = jnp.zeros((1, G), f32).at[0, :FH].set((b_ih + b_hh).astype(f32))
    wc_p = jnp.zeros((Hp, Op), f32).at[:H, :O].set(jnp.transpose(w_cls).astype(f32))
    bc_p = jnp.zeros((1, Op), f32).at[0, :O].set(b_cls.astype(f32))
    # TODO(synk): optionally cast the hoisted (non-recurrent) projection
    # operands to bfloat16 for the MXU; kept f32 to preserve 1e-5 parity.

    # ---- input: time-major, batch padded to a multiple of the batch tile ----
    Bp = _round_up(B, Bt)
    x_tm = jnp.transpose(x, (1, 0, 2)).astype(f32)         # (T, B, I)
    if Bp != B:
        x_tm = jnp.pad(x_tm, ((0, 0), (0, Bp - B), (0, 0)))

    kernel = functools.partial(
        _tft_kernel, hidden=H, hidden_pad=Hp, gate_width=G,
        aligned=plan["aligned"], unroll=plan["unroll"])

    cost = pl.CostEstimate(
        flops=int(2 * T * Bp * G * (I + Hp) + 2 * Bp * Hp * Op),
        transcendentals=int(T * Bp * (2 * G + Hp)),
        bytes_accessed=int(4 * (T * Bp * I + I * G + Hp * G + G
                                + Hp * Op + Op + Bp * Op)),
    )

    out = pl.pallas_call(
        kernel,
        out_shape=jax.ShapeDtypeStruct((Bp, Op), f32),
        grid=(Bp // Bt, T // Tc),
        in_specs=[
            pl.BlockSpec((Tc, Bt, I), lambda b, t: (t, b, 0)),   # x chunk
            pl.BlockSpec((I, G), lambda b, t: (0, 0)),           # W_ih
            pl.BlockSpec((Hp, G), lambda b, t: (0, 0)),          # W_hh
            pl.BlockSpec((1, G), lambda b, t: (0, 0)),           # bias
            pl.BlockSpec((Hp, Op), lambda b, t: (0, 0)),         # W_cls
            pl.BlockSpec((1, Op), lambda b, t: (0, 0)),          # b_cls
        ],
        out_specs=pl.BlockSpec((Bt, Op), lambda b, t: (b, 0)),
        scratch_shapes=[
            pltpu.VMEM((Tc, Bt, G), f32),    # hoisted x-projection (chunk)
            pltpu.VMEM((Bt, Hp), f32),       # h (persists across time chunks)
            pltpu.VMEM((Bt, Hp), f32),       # c
        ],
        compiler_params=pltpu.CompilerParams(
            dimension_semantics=("parallel", "arbitrary"),
            vmem_limit_bytes=plan["vmem_limit"]),
        cost_estimate=cost,
    )(x_tm, wih_p, whh_p, b_p, wc_p, bc_p)

    return out[:B, :O]


def _reference_forward(x, params):
    """Pure-JAX reference mirroring PyTorch nn.LSTM + nn.Linear (f32)."""
    if x.ndim == 2:
        x = x[:, None, :]
    B, T, _ = x.shape
    hi = jax.lax.Precision.HIGHEST
    w_ih, w_hh = params["w_ih"], params["w_hh"]
    b_ih, b_hh = params["b_ih"], params["b_hh"]
    H = w_hh.shape[1]
    h = jnp.zeros((B, H), jnp.float32)
    c = jnp.zeros((B, H), jnp.float32)
    for t in range(T):
        xt = x[:, t, :]
        gates = (jnp.dot(xt, w_ih.T, precision=hi) + b_ih
                 + jnp.dot(h, w_hh.T, precision=hi) + b_hh)
        i_g = jax.nn.sigmoid(gates[:, 0 * H:1 * H])
        f_g = jax.nn.sigmoid(gates[:, 1 * H:2 * H])
        g_g = jnp.tanh(gates[:, 2 * H:3 * H])
        o_g = jax.nn.sigmoid(gates[:, 3 * H:4 * H])
        c = f_g * c + i_g * g_g
        h = o_g * jnp.tanh(c)
    return jnp.dot(h, params["w_cls"].T, precision=hi) + params["b_cls"]


def init_params(key, input_size, hidden_size, output_size):
    """Deterministic synthetic parameters (PyTorch-style shapes)."""
    ks = jax.random.split(key, 6)
    scale = 1.0 / jnp.sqrt(hidden_size)
    u = lambda k, shape: jax.random.uniform(k, shape, jnp.float32, -scale, scale)
    return {
        "w_ih": u(ks[0], (4 * hidden_size, input_size)),
        "w_hh": u(ks[1], (4 * hidden_size, hidden_size)),
        "b_ih": u(ks[2], (4 * hidden_size,)),
        "b_hh": u(ks[3], (4 * hidden_size,)),
        "w_cls": u(ks[4], (output_size, hidden_size)),
        "b_cls": u(ks[5], (output_size,)),
    }


if __name__ == "__main__":
    key = jax.random.PRNGKey(0)
    k_param, k_x, k_p2, k_x2 = jax.random.split(key, 4)

    # --- main config (H=32 exercises the packed/roll gate path) --------------
    input_size, hidden_size, output_size = 4, 32, 4
    batch, seq_len = 2, 8
    params = init_params(k_param, input_size, hidden_size, output_size)
    x = jax.random.normal(k_x, (batch, seq_len, input_size), jnp.float32)

    y = jax.block_until_ready(temporal_fusion_transformer_forward(x, params))
    y_ref = _reference_forward(x, params)
    assert y.shape == (batch, output_size)
    assert jnp.allclose(y, y_ref, atol=1e-5, rtol=1e-5), "mismatch (packed path)"

    # --- time-chunked grid: exercises persistent h/c carry across chunks -----
    y_tc = jax.block_until_ready(
        temporal_fusion_transformer_forward(x, params, time_chunk=2))
    assert jnp.allclose(y_tc, y_ref, atol=1e-5, rtol=1e-5), "mismatch (T-tiled)"

    # --- 2-D input branch (unsqueeze to T = 1) -------------------------------
    y2 = jax.block_until_ready(
        temporal_fusion_transformer_forward(x[:, 0, :], params))
    assert jnp.allclose(y2, _reference_forward(x[:, 0, :], params),
                        atol=1e-5, rtol=1e-5), "mismatch (2-D input)"

    # --- lane-aligned H + multiple batch tiles + multiple time chunks --------
    params4 = init_params(k_p2, 6, 128, 3)
    x4 = jax.random.normal(k_x2, (12, 6, 6), jnp.float32)
    y4 = jax.block_until_ready(
        temporal_fusion_transformer_forward(x4, params4, time_chunk=3))
    assert jnp.allclose(y4, _reference_forward(x4, params4),
                        atol=1e-5, rtol=1e-5), "mismatch (aligned path)"

    print("KERNEL_OK")
</pallas_src>

<mosaic_0001>
module attributes {stable_mosaic.version = 11 : i64} {
  func.func @_tft_kernel(%arg0: i32, %arg1: i32, %arg2: memref<8x8x4xf32, #tpu.memory_space<vmem>>, %arg3: memref<4x128xf32, #tpu.memory_space<vmem>>, %arg4: memref<128x128xf32, #tpu.memory_space<vmem>>, %arg5: memref<1x128xf32, #tpu.memory_space<vmem>>, %arg6: memref<128x128xf32, #tpu.memory_space<vmem>>, %arg7: memref<1x128xf32, #tpu.memory_space<vmem>>, %arg8: memref<8x128xf32, #tpu.memory_space<vmem>>, %arg9: memref<8x8x128xf32, #tpu.memory_space<vmem>>, %arg10: memref<8x128xf32, #tpu.memory_space<vmem>>, %arg11: memref<8x128xf32, #tpu.memory_space<vmem>>) attributes {dimension_semantics = [#tpu.dimension_semantics<parallel>, #tpu.dimension_semantics<arbitrary>], iteration_bounds = array<i64: 1, 1>, scalar_prefetch = 0 : i64, scratch_operands = 3 : i64, tpu.core_type = #tpu.core_type<tc>, window_params = [{transform_indices = @transform_0, window_bounds = array<i64: 8, 8, 4>}, {pipeline_mode = #tpu.pipeline_mode<synchronous>, transform_indices = @transform_1, window_bounds = array<i64: 4, 128>}, {pipeline_mode = #tpu.pipeline_mode<synchronous>, transform_indices = @transform_2, window_bounds = array<i64: 128, 128>}, {pipeline_mode = #tpu.pipeline_mode<synchronous>, transform_indices = @transform_3, window_bounds = array<i64: 1, 128>}, {pipeline_mode = #tpu.pipeline_mode<synchronous>, transform_indices = @transform_4, window_bounds = array<i64: 128, 128>}, {pipeline_mode = #tpu.pipeline_mode<synchronous>, transform_indices = @transform_5, window_bounds = array<i64: 1, 128>}, {transform_indices = @transform_6, window_bounds = array<i64: 8, 128>}]} {
    %c0_i32 = arith.constant 0 : i32
    %0 = arith.cmpi eq, %arg1, %c0_i32 : i32
    %1 = arith.extui %0 : i1 to i32
    %c0_i32_0 = arith.constant 0 : i32
    %2 = arith.cmpi ne, %1, %c0_i32_0 : i32
    scf.if %2 {
      %cst_78 = arith.constant 0.000000e+00 : f32
      %186 = vector.broadcast %cst_78 : f32 to vector<8x128xf32>
      %c0_79 = arith.constant 0 : index
      %c0_80 = arith.constant 0 : index
      %187 = vector.load %arg10[%c0_79, %c0_80] : memref<8x128xf32, #tpu.memory_space<vmem>>, vector<8x128xf32>
      tpu.vector_store %arg10[%c0_79, %c0_80], %186 {strides = array<i32>} : memref<8x128xf32, #tpu.memory_space<vmem>>, vector<8x128xf32>,
      %cst_81 = arith.constant 0.000000e+00 : f32
      %188 = vector.broadcast %cst_81 : f32 to vector<8x128xf32>
      %c0_82 = arith.constant 0 : index
      %c0_83 = arith.constant 0 : index
      %189 = vector.load %arg11[%c0_82, %c0_83] : memref<8x128xf32, #tpu.memory_space<vmem>>, vector<8x128xf32>
      tpu.vector_store %arg11[%c0_82, %c0_83], %188 {strides = array<i32>} : memref<8x128xf32, #tpu.memory_space<vmem>>, vector<8x128xf32>,
    } else {
    }
    %c0 = arith.constant 0 : index
    %c0_1 = arith.constant 0 : index
    %c0_2 = arith.constant 0 : index
    %3 = vector.load %arg2[%c0, %c0_1, %c0_2] : memref<8x8x4xf32, #tpu.memory_space<vmem>>, vector<8x8x4xf32>
    %4 = vector.shape_cast %3 : vector<8x8x4xf32> to vector<64x4xf32>
    %c0_3 = arith.constant 0 : index
    %c0_4 = arith.constant 0 : index
    %5 = vector.load %arg3[%c0_3, %c0_4] : memref<4x128xf32, #tpu.memory_space<vmem>>, vector<4x128xf32>
    %cst = arith.constant dense<0.000000e+00> : vector<64x128xf32>
    %6 = tpu.matmul %4, %5, %cst {dimension_numbers = #tpu.dot_dimension_numbers<[1], [0], [0], [1], [0, 0, 1, 1], [], []>} : vector<64x4xf32>, vector<4x128xf32>, vector<64x128xf32> -> vector<64x128xf32>
    %c0_5 = arith.constant 0 : index
    %c0_6 = arith.constant 0 : index
    %7 = vector.load %arg5[%c0_5, %c0_6] : memref<1x128xf32, #tpu.memory_space<vmem>>, vector<1x128xf32>
    %8 = vector.broadcast %7 : vector<1x128xf32> to vector<64x128xf32>
    %9 = arith.addf %6, %8 : vector<64x128xf32>
    %10 = vector.shape_cast %9 : vector<64x128xf32> to vector<8x8x128xf32>
    %c0_7 = arith.constant 0 : index
    %c0_8 = arith.constant 0 : index
    %c0_9 = arith.constant 0 : index
    %11 = vector.load %arg9[%c0_7, %c0_8, %c0_9] : memref<8x8x128xf32, #tpu.memory_space<vmem>>, vector<8x8x128xf32>
    tpu.vector_store %arg9[%c0_7, %c0_8, %c0_9], %10 {strides = array<i32>} : memref<8x8x128xf32, #tpu.memory_space<vmem>>, vector<8x8x128xf32>,
    %c0_10 = arith.constant 0 : index
    %c0_11 = arith.constant 0 : index
    %12 = vector.load %arg4[%c0_10, %c0_11] : memref<128x128xf32, #tpu.memory_space<vmem>>, vector<128x128xf32>
    %13 = tpu.iota {dimensions = array<i32: 1>} : vector<8x128xi32>
    %c64_i32 = arith.constant 64 : i32
    %14 = vector.broadcast %c64_i32 : i32 to vector<8x128xi32>
    %15 = arith.cmpi sge, %13, %14 : vector<8x128xi32>
    %c96_i32 = arith.constant 96 : i32
    %16 = vector.broadcast %c96_i32 : i32 to vector<8x128xi32>
    %17 = arith.cmpi slt, %13, %16 : vector<8x128xi32>
    %18 = arith.andi %15, %17 : vector<8x128xi1>
    %c0_12 = arith.constant 0 : index
    %c0_13 = arith.constant 0 : index
    %19 = vector.load %arg10[%c0_12, %c0_13] : memref<8x128xf32, #tpu.memory_space<vmem>>, vector<8x128xf32>
    %c0_14 = arith.constant 0 : index
    %c0_15 = arith.constant 0 : index
    %20 = vector.load %arg11[%c0_14, %c0_15] : memref<8x128xf32, #tpu.memory_space<vmem>>, vector<8x128xf32>
    %c0_i32_16 = arith.constant 0 : i32
    %21 = arith.index_cast %c0_i32_16 : i32 to index
    %c0_17 = arith.constant 0 : index
    %c0_18 = arith.constant 0 : index
    %22 = vector.load %arg9[%21, %c0_17, %c0_18] : memref<8x8x128xf32, #tpu.memory_space<vmem>>, vector<1x8x128xf32>
    %23 = vector.shape_cast %22 : vector<1x8x128xf32> to vector<8x128xf32>
    %cst_19 = arith.constant dense<0.000000e+00> : vector<8x128xf32>
    %24 = tpu.matmul %19, %12, %cst_19 {dimension_numbers = #tpu.dot_dimension_numbers<[1], [0], [0], [1], [0, 0, 1, 1], [], []>} : vector<8x128xf32>, vector<128x128xf32>, vector<8x128xf32> -> vector<8x128xf32>
    %25 = arith.addf %23, %24 : vector<8x128xf32>
    %26 = math.tanh %25 : vector<8x128xf32>
    %27 = arith.negf %25 : vector<8x128xf32>
    %28 = math.exp %27 : vector<8x128xf32>
    %cst_20 = arith.constant 1.000000e+00 : f32
    %29 = vector.broadcast %cst_20 : f32 to vector<8x128xf32>
    %30 = arith.addf %29, %28 : vector<8x128xf32>
    %31 = arith.divf %29, %30 : vector<8x128xf32>
    %32 = arith.select %18, %26, %31 : vector<8x128xi1>, vector<8x128xf32>
    %c96_i32_21 = arith.constant 96 : i32
    %33 = tpu.dynamic_rotate %32 by %c96_i32_21 dim 1 : vector<8x128xf32>, i32 -> vector<8x128xf32>
    %c64_i32_22 = arith.constant 64 : i32
    %34 = tpu.dynamic_rotate %32 by %c64_i32_22 dim 1 : vector<8x128xf32>, i32 -> vector<8x128xf32>
    %c32_i32 = arith.constant 32 : i32
    %35 = tpu.dynamic_rotate %32 by %c32_i32 dim 1 : vector<8x128xf32>, i32 -> vector<8x128xf32>
    %36 = arith.mulf %33, %20 : vector<8x128xf32>
    %37 = arith.mulf %32, %34 : vector<8x128xf32>
    %38 = arith.addf %36, %37 : vector<8x128xf32>
    %39 = math.tanh %38 : vector<8x128xf32>
    %40 = arith.mulf %35, %39 : vector<8x128xf32>
    %c1_i32 = arith.constant 1 : i32
    %41 = arith.index_cast %c1_i32 : i32 to index
    %c0_23 = arith.constant 0 : index
    %c0_24 = arith.constant 0 : index
    %42 = vector.load %arg9[%41, %c0_23, %c0_24] : memref<8x8x128xf32, #tpu.memory_space<vmem>>, vector<1x8x128xf32>
    %43 = vector.shape_cast %42 : vector<1x8x128xf32> to vector<8x128xf32>
    %cst_25 = arith.constant dense<0.000000e+00> : vector<8x128xf32>
    %44 = tpu.matmul %40, %12, %cst_25 {dimension_numbers = #tpu.dot_dimension_numbers<[1], [0], [0], [1], [0, 0, 1, 1], [], []>} : vector<8x128xf32>, vector<128x128xf32>, vector<8x128xf32> -> vector<8x128xf32>
    %45 = arith.addf %43, %44 : vector<8x128xf32>
    %46 = math.tanh %45 : vector<8x128xf32>
    %47 = arith.negf %45 : vector<8x128xf32>
    %48 = math.exp %47 : vector<8x128xf32>
    %cst_26 = arith.constant 1.000000e+00 : f32
    %49 = vector.broadcast %cst_26 : f32 to vector<8x128xf32>
    %50 = arith.addf %49, %48 : vector<8x128xf32>
    %51 = arith.divf %49, %50 : vector<8x128xf32>
    %52 = arith.select %18, %46, %51 : vector<8x128xi1>, vector<8x128xf32>
    %c96_i32_27 = arith.constant 96 : i32
    %53 = tpu.dynamic_rotate %52 by %c96_i32_27 dim 1 : vector<8x128xf32>, i32 -> vector<8x128xf32>
    %c64_i32_28 = arith.constant 64 : i32
    %54 = tpu.dynamic_rotate %52 by %c64_i32_28 dim 1 : vector<8x128xf32>, i32 -> vector<8x128xf32>
    %c32_i32_29 = arith.constant 32 : i32
    %55 = tpu.dynamic_rotate %52 by %c32_i32_29 dim 1 : vector<8x128xf32>, i32 -> vector<8x128xf32>
    %56 = arith.mulf %53, %38 : vector<8x128xf32>
    %57 = arith.mulf %52, %54 : vector<8x128xf32>
    %58 = arith.addf %56, %57 : vector<8x128xf32>
    %59 = math.tanh %58 : vector<8x128xf32>
    %60 = arith.mulf %55, %59 : vector<8x128xf32>
    %c2_i32 = arith.constant 2 : i32
    %61 = arith.index_cast %c2_i32 : i32 to index
    %c0_30 = arith.constant 0 : index
    %c0_31 = arith.constant 0 : index
    %62 = vector.load %arg9[%61, %c0_30, %c0_31] : memref<8x8x128xf32, #tpu.memory_space<vmem>>, vector<1x8x128xf32>
    %63 = vector.shape_cast %62 : vector<1x8x128xf32> to vector<8x128xf32>
    %cst_32 = arith.constant dense<0.000000e+00> : vector<8x128xf32>
    %64 = tpu.matmul %60, %12, %cst_32 {dimension_numbers = #tpu.dot_dimension_numbers<[1], [0], [0], [1], [0, 0, 1, 1], [], []>} : vector<8x128xf32>, vector<128x128xf32>, vector<8x128xf32> -> vector<8x128xf32>
    %65 = arith.addf %63, %64 : vector<8x128xf32>
    %66 = math.tanh %65 : vector<8x128xf32>
    %67 = arith.negf %65 : vector<8x128xf32>
    %68 = math.exp %67 : vector<8x128xf32>
    %cst_33 = arith.constant 1.000000e+00 : f32
    %69 = vector.broadcast %cst_33 : f32 to vector<8x128xf32>
    %70 = arith.addf %69, %68 : vector<8x128xf32>
    %71 = arith.divf %69, %70 : vector<8x128xf32>
    %72 = arith.select %18, %66, %71 : vector<8x128xi1>, vector<8x128xf32>
    %c96_i32_34 = arith.constant 96 : i32
    %73 = tpu.dynamic_rotate %72 by %c96_i32_34 dim 1 : vector<8x128xf32>, i32 -> vector<8x128xf32>
    %c64_i32_35 = arith.constant 64 : i32
    %74 = tpu.dynamic_rotate %72 by %c64_i32_35 dim 1 : vector<8x128xf32>, i32 -> vector<8x128xf32>
    %c32_i32_36 = arith.constant 32 : i32
    %75 = tpu.dynamic_rotate %72 by %c32_i32_36 dim 1 : vector<8x128xf32>, i32 -> vector<8x128xf32>
    %76 = arith.mulf %73, %58 : vector<8x128xf32>
    %77 = arith.mulf %72, %74 : vector<8x128xf32>
    %78 = arith.addf %76, %77 : vector<8x128xf32>
    %79 = math.tanh %78 : vector<8x128xf32>
    %80 = arith.mulf %75, %79 : vector<8x128xf32>
    %c3_i32 = arith.constant 3 : i32
    %81 = arith.index_cast %c3_i32 : i32 to index
    %c0_37 = arith.constant 0 : index
    %c0_38 = arith.constant 0 : index
    %82 = vector.load %arg9[%81, %c0_37, %c0_38] : memref<8x8x128xf32, #tpu.memory_space<vmem>>, vector<1x8x128xf32>
    %83 = vector.shape_cast %82 : vector<1x8x128xf32> to vector<8x128xf32>
    %cst_39 = arith.constant dense<0.000000e+00> : vector<8x128xf32>
    %84 = tpu.matmul %80, %12, %cst_39 {dimension_numbers = #tpu.dot_dimension_numbers<[1], [0], [0], [1], [0, 0, 1, 1], [], []>} : vector<8x128xf32>, vector<128x128xf32>, vector<8x128xf32> -> vector<8x128xf32>
    %85 = arith.addf %83, %84 : vector<8x128xf32>
    %86 = math.tanh %85 : vector<8x128xf32>
    %87 = arith.negf %85 : vector<8x128xf32>
    %88 = math.exp %87 : vector<8x128xf32>
    %cst_40 = arith.constant 1.000000e+00 : f32
    %89 = vector.broadcast %cst_40 : f32 to vector<8x128xf32>
    %90 = arith.addf %89, %88 : vector<8x128xf32>
    %91 = arith.divf %89, %90 : vector<8x128xf32>
    %92 = arith.select %18, %86, %91 : vector<8x128xi1>, vector<8x128xf32>
    %c96_i32_41 = arith.constant 96 : i32
    %93 = tpu.dynamic_rotate %92 by %c96_i32_41 dim 1 : vector<8x128xf32>, i32 -> vector<8x128xf32>
    %c64_i32_42 = arith.constant 64 : i32
    %94 = tpu.dynamic_rotate %92 by %c64_i32_42 dim 1 : vector<8x128xf32>, i32 -> vector<8x128xf32>
    %c32_i32_43 = arith.constant 32 : i32
    %95 = tpu.dynamic_rotate %92 by %c32_i32_43 dim 1 : vector<8x128xf32>, i32 -> vector<8x128xf32>
    %96 = arith.mulf %93, %78 : vector<8x128xf32>
    %97 = arith.mulf %92, %94 : vector<8x128xf32>
    %98 = arith.addf %96, %97 : vector<8x128xf32>
    %99 = math.tanh %98 : vector<8x128xf32>
    %100 = arith.mulf %95, %99 : vector<8x128xf32>
    %c4_i32 = arith.constant 4 : i32
    %101 = arith.index_cast %c4_i32 : i32 to index
    %c0_44 = arith.constant 0 : index
    %c0_45 = arith.constant 0 : index
    %102 = vector.load %arg9[%101, %c0_44, %c0_45] : memref<8x8x128xf32, #tpu.memory_space<vmem>>, vector<1x8x128xf32>
    %103 = vector.shape_cast %102 : vector<1x8x128xf32> to vector<8x128xf32>
    %cst_46 = arith.constant dense<0.000000e+00> : vector<8x128xf32>
    %104 = tpu.matmul %100, %12, %cst_46 {dimension_numbers = #tpu.dot_dimension_numbers<[1], [0], [0], [1], [0, 0, 1, 1], [], []>} : vector<8x128xf32>, vector<128x128xf32>, vector<8x128xf32> -> vector<8x128xf32>
    %105 = arith.addf %103, %104 : vector<8x128xf32>
    %106 = math.tanh %105 : vector<8x128xf32>
    %107 = arith.negf %105 : vector<8x128xf32>
    %108 = math.exp %107 : vector<8x128xf32>
    %cst_47 = arith.constant 1.000000e+00 : f32
    %109 = vector.broadcast %cst_47 : f32 to vector<8x128xf32>
    %110 = arith.addf %109, %108 : vector<8x128xf32>
    %111 = arith.divf %109, %110 : vector<8x128xf32>
    %112 = arith.select %18, %106, %111 : vector<8x128xi1>, vector<8x128xf32>
    %c96_i32_48 = arith.constant 96 : i32
    %113 = tpu.dynamic_rotate %112 by %c96_i32_48 dim 1 : vector<8x128xf32>, i32 -> vector<8x128xf32>
    %c64_i32_49 = arith.constant 64 : i32
    %114 = tpu.dynamic_rotate %112 by %c64_i32_49 dim 1 : vector<8x128xf32>, i32 -> vector<8x128xf32>
    %c32_i32_50 = arith.constant 32 : i32
    %115 = tpu.dynamic_rotate %112 by %c32_i32_50 dim 1 : vector<8x128xf32>, i32 -> vector<8x128xf32>
    %116 = arith.mulf %113, %98 : vector<8x128xf32>
    %117 = arith.mulf %112, %114 : vector<8x128xf32>
    %118 = arith.addf %116, %117 : vector<8x128xf32>
    %119 = math.tanh %118 : vector<8x128xf32>
    %120 = arith.mulf %115, %119 : vector<8x128xf32>
    %c5_i32 = arith.constant 5 : i32
    %121 = arith.index_cast %c5_i32 : i32 to index
    %c0_51 = arith.constant 0 : index
    %c0_52 = arith.constant 0 : index
    %122 = vector.load %arg9[%121, %c0_51, %c0_52] : memref<8x8x128xf32, #tpu.memory_space<vmem>>, vector<1x8x128xf32>
    %123 = vector.shape_cast %122 : vector<1x8x128xf32> to vector<8x128xf32>
    %cst_53 = arith.constant dense<0.000000e+00> : vector<8x128xf32>
    %124 = tpu.matmul %120, %12, %cst_53 {dimension_numbers = #tpu.dot_dimension_numbers<[1], [0], [0], [1], [0, 0, 1, 1], [], []>} : vector<8x128xf32>, vector<128x128xf32>, vector<8x128xf32> -> vector<8x128xf32>
    %125 = arith.addf %123, %124 : vector<8x128xf32>
    %126 = math.tanh %125 : vector<8x128xf32>
    %127 = arith.negf %125 : vector<8x128xf32>
    %128 = math.exp %127 : vector<8x128xf32>
    %cst_54 = arith.constant 1.000000e+00 : f32
    %129 = vector.broadcast %cst_54 : f32 to vector<8x128xf32>
    %130 = arith.addf %129, %128 : vector<8x128xf32>
    %131 = arith.divf %129, %130 : vector<8x128xf32>
    %132 = arith.select %18, %126, %131 : vector<8x128xi1>, vector<8x128xf32>
    %c96_i32_55 = arith.constant 96 : i32
    %133 = tpu.dynamic_rotate %132 by %c96_i32_55 dim 1 : vector<8x128xf32>, i32 -> vector<8x128xf32>
    %c64_i32_56 = arith.constant 64 : i32
    %134 = tpu.dynamic_rotate %132 by %c64_i32_56 dim 1 : vector<8x128xf32>, i32 -> vector<8x128xf32>
    %c32_i32_57 = arith.constant 32 : i32
    %135 = tpu.dynamic_rotate %132 by %c32_i32_57 dim 1 : vector<8x128xf32>, i32 -> vector<8x128xf32>
    %136 = arith.mulf %133, %118 : vector<8x128xf32>
    %137 = arith.mulf %132, %134 : vector<8x128xf32>
    %138 = arith.addf %136, %137 : vector<8x128xf32>
    %139 = math.tanh %138 : vector<8x128xf32>
    %140 = arith.mulf %135, %139 : vector<8x128xf32>
    %c6_i32 = arith.constant 6 : i32
    %141 = arith.index_cast %c6_i32 : i32 to index
    %c0_58 = arith.constant 0 : index
    %c0_59 = arith.constant 0 : index
    %142 = vector.load %arg9[%141, %c0_58, %c0_59] : memref<8x8x128xf32, #tpu.memory_space<vmem>>, vector<1x8x128xf32>
    %143 = vector.shape_cast %142 : vector<1x8x128xf32> to vector<8x128xf32>
    %cst_60 = arith.constant dense<0.000000e+00> : vector<8x128xf32>
    %144 = tpu.matmul %140, %12, %cst_60 {dimension_numbers = #tpu.dot_dimension_numbers<[1], [0], [0], [1], [0, 0, 1, 1], [], []>} : vector<8x128xf32>, vector<128x128xf32>, vector<8x128xf32> -> vector<8x128xf32>
    %145 = arith.addf %143, %144 : vector<8x128xf32>
    %146 = math.tanh %145 : vector<8x128xf32>
    %147 = arith.negf %145 : vector<8x128xf32>
    %148 = math.exp %147 : vector<8x128xf32>
    %cst_61 = arith.constant 1.000000e+00 : f32
    %149 = vector.broadcast %cst_61 : f32 to vector<8x128xf32>
    %150 = arith.addf %149, %148 : vector<8x128xf32>
    %151 = arith.divf %149, %150 : vector<8x128xf32>
    %152 = arith.select %18, %146, %151 : vector<8x128xi1>, vector<8x128xf32>
    %c96_i32_62 = arith.constant 96 : i32
    %153 = tpu.dynamic_rotate %152 by %c96_i32_62 dim 1 : vector<8x128xf32>, i32 -> vector<8x128xf32>
    %c64_i32_63 = arith.constant 64 : i32
    %154 = tpu.dynamic_rotate %152 by %c64_i32_63 dim 1 : vector<8x128xf32>, i32 -> vector<8x128xf32>
    %c32_i32_64 = arith.constant 32 : i32
    %155 = tpu.dynamic_rotate %152 by %c32_i32_64 dim 1 : vector<8x128xf32>, i32 -> vector<8x128xf32>
    %156 = arith.mulf %153, %138 : vector<8x128xf32>
    %157 = arith.mulf %152, %154 : vector<8x128xf32>
    %158 = arith.addf %156, %157 : vector<8x128xf32>
    %159 = math.tanh %158 : vector<8x128xf32>
    %160 = arith.mulf %155, %159 : vector<8x128xf32>
    %c7_i32 = arith.constant 7 : i32
    %161 = arith.index_cast %c7_i32 : i32 to index
    %c0_65 = arith.constant 0 : index
    %c0_66 = arith.constant 0 : index
    %162 = vector.load %arg9[%161, %c0_65, %c0_66] : memref<8x8x128xf32, #tpu.memory_space<vmem>>, vector<1x8x128xf32>
    %163 = vector.shape_cast %162 : vector<1x8x128xf32> to vector<8x128xf32>
    %cst_67 = arith.constant dense<0.000000e+00> : vector<8x128xf32>
    %164 = tpu.matmul %160, %12, %cst_67 {dimension_numbers = #tpu.dot_dimension_numbers<[1], [0], [0], [1], [0, 0, 1, 1], [], []>} : vector<8x128xf32>, vector<128x128xf32>, vector<8x128xf32> -> vector<8x128xf32>
    %165 = arith.addf %163, %164 : vector<8x128xf32>
    %166 = math.tanh %165 : vector<8x128xf32>
    %167 = arith.negf %165 : vector<8x128xf32>
    %168 = math.exp %167 : vector<8x128xf32>
    %cst_68 = arith.constant 1.000000e+00 : f32
    %169 = vector.broadcast %cst_68 : f32 to vector<8x128xf32>
    %170 = arith.addf %169, %168 : vector<8x128xf32>
    %171 = arith.divf %169, %170 : vector<8x128xf32>
    %172 = arith.select %18, %166, %171 : vector<8x128xi1>, vector<8x128xf32>
    %c96_i32_69 = arith.constant 96 : i32
    %173 = tpu.dynamic_rotate %172 by %c96_i32_69 dim 1 : vector<8x128xf32>, i32 -> vector<8x128xf32>
    %c64_i32_70 = arith.constant 64 : i32
    %174 = tpu.dynamic_rotate %172 by %c64_i32_70 dim 1 : vector<8x128xf32>, i32 -> vector<8x128xf32>
    %c32_i32_71 = arith.constant 32 : i32
    %175 = tpu.dynamic_rotate %172 by %c32_i32_71 dim 1 : vector<8x128xf32>, i32 -> vector<8x128xf32>
    %176 = arith.mulf %173, %158 : vector<8x128xf32>
    %177 = arith.mulf %172, %174 : vector<8x128xf32>
    %178 = arith.addf %176, %177 : vector<8x128xf32>
    %179 = math.tanh %178 : vector<8x128xf32>
    %180 = arith.mulf %175, %179 : vector<8x128xf32>
    %c8_i32 = arith.constant 8 : i32
    %c0_72 = arith.constant 0 : index
    %c0_73 = arith.constant 0 : index
    %181 = vector.load %arg10[%c0_72, %c0_73] : memref<8x128xf32, #tpu.memory_space<vmem>>, vector<8x128xf32>
    tpu.vector_store %arg10[%c0_72, %c0_73], %180 {strides = array<i32>} : memref<8x128xf32, #tpu.memory_space<vmem>>, vector<8x128xf32>,
    %c0_74 = arith.constant 0 : index
    %c0_75 = arith.constant 0 : index
    %182 = vector.load %arg11[%c0_74, %c0_75] : memref<8x128xf32, #tpu.memory_space<vmem>>, vector<8x128xf32>
    tpu.vector_store %arg11[%c0_74, %c0_75], %178 {strides = array<i32>} : memref<8x128xf32, #tpu.memory_space<vmem>>, vector<8x128xf32>,
    %c0_i32_76 = arith.constant 0 : i32
    %183 = arith.cmpi eq, %arg1, %c0_i32_76 : i32
    %184 = arith.extui %183 : i1 to i32
    %c0_i32_77 = arith.constant 0 : i32
    %185 = arith.cmpi ne, %184, %c0_i32_77 : i32
    scf.if %185 {
      %c0_78 = arith.constant 0 : index
      %c0_79 = arith.constant 0 : index
      %186 = vector.load %arg6[%c0_78, %c0_79] : memref<128x128xf32, #tpu.memory_space<vmem>>, vector<128x128xf32>
      %cst_80 = arith.constant dense<0.000000e+00> : vector<8x128xf32>
      %187 = tpu.matmul %180, %186, %cst_80 {dimension_numbers = #tpu.dot_dimension_numbers<[1], [0], [0], [1], [0, 0, 1, 1], [], []>} : vector<8x128xf32>, vector<128x128xf32>, vector<8x128xf32> -> vector<8x128xf32>
      %c0_81 = arith.constant 0 : index
      %c0_82 = arith.constant 0 : index
      %188 = vector.load %arg7[%c0_81, %c0_82] : memref<1x128xf32, #tpu.memory_space<vmem>>, vector<1x128xf32>
      %189 = vector.broadcast %188 : vector<1x128xf32> to vector<8x128xf32>
      %190 = arith.addf %187, %189 : vector<8x128xf32>
      %c0_83 = arith.constant 0 : index
      %c0_84 = arith.constant 0 : index
      %191 = vector.load %arg8[%c0_83, %c0_84] : memref<8x128xf32, #tpu.memory_space<vmem>>, vector<8x128xf32>
      tpu.vector_store %arg8[%c0_83, %c0_84], %190 {strides = array<i32>} : memref<8x128xf32, #tpu.memory_space<vmem>>, vector<8x128xf32>,
    } else {
    }
    return
  }
  func.func @transform_0(%arg0: i32, %arg1: i32) -> (i32, i32, i32) {
    %c0_i32 = arith.constant 0 : i32
    %c0_i32_0 = arith.constant 0 : i32
    return %arg1, %arg0, %c0_i32 : i32, i32, i32
  }
  func.func @transform_1(%arg0: i32, %arg1: i32) -> (i32, i32) {
    %c0_i32 = arith.constant 0 : i32
    %c0_i32_0 = arith.constant 0 : i32
    %c0_i32_1 = arith.constant 0 : i32
    return %c0_i32, %c0_i32_0 : i32, i32
  }
  func.func @transform_2(%arg0: i32, %arg1: i32) -> (i32, i32) {
    %c0_i32 = arith.constant 0 : i32
    %c0_i32_0 = arith.constant 0 : i32
    %c0_i32_1 = arith.constant 0 : i32
    return %c0_i32, %c0_i32_0 : i32, i32
  }
  func.func @transform_3(%arg0: i32, %arg1: i32) -> (i32, i32) {
    %c0_i32 = arith.constant 0 : i32
    %c0_i32_0 = arith.constant 0 : i32
    %c0_i32_1 = arith.constant 0 : i32
    return %c0_i32, %c0_i32_0 : i32, i32
  }
  func.func @transform_4(%arg0: i32, %arg1: i32) -> (i32, i32) {
    %c0_i32 = arith.constant 0 : i32
    %c0_i32_0 = arith.constant 0 : i32
    %c0_i32_1 = arith.constant 0 : i32
    return %c0_i32, %c0_i32_0 : i32, i32
  }
  func.func @transform_5(%arg0: i32, %arg1: i32) -> (i32, i32) {
    %c0_i32 = arith.constant 0 : i32
    %c0_i32_0 = arith.constant 0 : i32
    %c0_i32_1 = arith.constant 0 : i32
    return %c0_i32, %c0_i32_0 : i32, i32
  }
  func.func @transform_6(%arg0: i32, %arg1: i32) -> (i32, i32) {
    %c0_i32 = arith.constant 0 : i32
    %c0_i32_0 = arith.constant 0 : i32
    return %arg0, %c0_i32 : i32, i32
  }
}

</mosaic_0001>

<llo_original>
// kernel: tpu_custom_call.1
$region0: #{tpu_custom_call.1}
  #allocation0 [shape = 'u32[]', space=smem, size = 0x4, offset = 0x4, fixed_abs, tag = 'smem constant byte address 0x4 - core index']
  #allocation1 [shape = 'u32[144,128]{1,0:T(1,128)}', space=vmem, size = 0x12000, scoped, tag = 'internal scratch']
  #allocation2 [shape = 'f32[8,8,128]{2,1,0:T(8,128)}', space=vmem, size = 0x8000, scoped, tag = 'scratch operand']
  #allocation3 [shape = 'f32[8,128]{1,0:T(8,128)}', space=vmem, size = 0x1000, scoped, tag = 'scratch operand']
  #allocation4 [shape = 'f32[8,128]{1,0:T(8,128)}', space=vmem, size = 0x1000, scoped, tag = 'scratch operand']
  %s0 = inlined_call_operand.vmem [shape: f32[8,8,4], index: 0, kind: input, shape index: {}]
  %s1 = inlined_call_operand.vmem [shape: f32[4,128], index: 1, kind: input, shape index: {}]
  %s2 = inlined_call_operand.hbm [shape: f32[128,128], index: 2, kind: input, shape index: {}]
  %s3 = inlined_call_operand.vmem [shape: f32[1,128], index: 3, kind: input, shape index: {}]
  %s4 = inlined_call_operand.hbm [shape: f32[128,128], index: 4, kind: input, shape index: {}]
  %s5 = inlined_call_operand.vmem [shape: f32[1,128], index: 5, kind: input, shape index: {}]
  %s6 = inlined_call_operand.hbm [shape: f32[8,128], index: 6, kind: output, shape index: {}]
  %s7 = sld [smem:[#allocation0]]
  $region50: #{tpu_custom_call.1} parent=0
    _
  %s9 = ssub.s32 1, %s7
  %s10 = scalar_select 0, %s9, %s7
  $region1: #{tpu_custom_call.1} parent=0
    #allocation5 [shape = 'u8[65536]{0}', space=vmem, size = 0x10000, scoped, tag = 'input window, operand 2, single buffered']
    #allocation6 [shape = 's32[1]{0}', space=sflag, size = 0x4, scoped, tag = 'scoped memory for tpu_custom_call.1']
    #allocation7 [shape = 's32[1]{0}', space=sflag, size = 0x4, scoped, tag = 'scoped memory for tpu_custom_call.1']
    #allocation8 [shape = 'u8[65536]{0}', space=vmem, size = 0x10000, scoped, tag = 'input window, operand 4, single buffered']
    #allocation9 [shape = 's32[1]{0}', space=sflag, size = 0x4, scoped, tag = 'scoped memory for tpu_custom_call.1']
    #allocation10 [shape = 'u8[4096]{0}', space=vmem, size = 0x1000, scoped, tag = 'output window, operand 0, single buffered']
    %11 = vsyncpa [#allocation6], 0
    %12 = vsyncpa [#allocation9], 0
    %13 = vsyncpa [#allocation7], 0
    // Predicated region
    $region2: #{tpu_custom_call.1} parent=1 // pred_check
      _
    $region3: #{tpu_custom_call.1} parent=1 // pred_check_branch
      %15 = sbr.rel (0) target = $region5
    $region4: #{tpu_custom_call.1} parent=1 // pred_region
      _
    $region5: #{tpu_custom_call.1} parent=1 // pred_fallthru
      _
    // Predicated region
    $region6: #{tpu_custom_call.1} parent=1 // pred_check
      _
    $region7: #{tpu_custom_call.1} parent=1 // pred_check_branch
      %17 = sbr.rel (0) target = $region9
    $region8: #{tpu_custom_call.1} parent=1 // pred_region
      _
    $region9: #{tpu_custom_call.1} parent=1 // pred_fallthru
      _
    // Predicated region
    $region10: #{tpu_custom_call.1} parent=1 // pred_check
      _
    $region11: #{tpu_custom_call.1} parent=1 // pred_check_branch
      %19 = sbr.rel (0) target = $region13
    $region12: #{tpu_custom_call.1} parent=1 // pred_region
      %s21 = ssub.s32 2048, 2048
      %22 = vsyncadd [#allocation6], %s21
      %s23 = sshll.u32 [#allocation5], 4
      %s24 = int_to_ptr.vmem [resolvable:$true] %s23
      %29 = dma.hbm_to_vmem [thread:$0]  %s2, 2048, %s24, [#allocation6], 128, 128, 8
    $region13: #{tpu_custom_call.1} parent=1 // pred_fallthru
      _
    // Predicated region
    $region14: #{tpu_custom_call.1} parent=1 // pred_check
      _
    $region15: #{tpu_custom_call.1} parent=1 // pred_check_branch
      %31 = sbr.rel (0) target = $region17
    $region16: #{tpu_custom_call.1} parent=1 // pred_region
      _
    $region17: #{tpu_custom_call.1} parent=1 // pred_fallthru
      _
    // Predicated region
    $region18: #{tpu_custom_call.1} parent=1 // pred_check
      _
    $region19: #{tpu_custom_call.1} parent=1 // pred_check_branch
      %33 = sbr.rel (0) target = $region21
    $region20: #{tpu_custom_call.1} parent=1 // pred_region
      %s35 = ssub.s32 2048, 2048
      %36 = vsyncadd [#allocation9], %s35
      %s37 = sshll.u32 [#allocation8], 4
      %s38 = int_to_ptr.vmem [resolvable:$true] %s37
      %43 = dma.hbm_to_vmem [thread:$0]  %s4, 2048, %s38, [#allocation9], 128, 128, 8
    $region21: #{tpu_custom_call.1} parent=1 // pred_fallthru
      _
    // Predicated region
    $region22: #{tpu_custom_call.1} parent=1 // pred_check
      _
    $region23: #{tpu_custom_call.1} parent=1 // pred_check_branch
      %45 = sbr.rel (0) target = $region25
    $region24: #{tpu_custom_call.1} parent=1 // pred_region
      _
    $region25: #{tpu_custom_call.1} parent=1 // pred_fallthru
      _
    // Predicated region
    $region26: #{tpu_custom_call.1} parent=1 // pred_check
      _
    $region27: #{tpu_custom_call.1} parent=1 // pred_check_branch
      %47 = sbr.rel (0) target = $region29
    $region28: #{tpu_custom_call.1} parent=1 // pred_region
      %48 = dma.done [#allocation6], 2048
    $region29: #{tpu_custom_call.1} parent=1 // pred_fallthru
      _
    // Predicated region
    $region30: #{tpu_custom_call.1} parent=1 // pred_check
      _
    $region31: #{tpu_custom_call.1} parent=1 // pred_check_branch
      %50 = sbr.rel (0) target = $region33
    $region32: #{tpu_custom_call.1} parent=1 // pred_region
      %51 = dma.done [#allocation9], 2048
    $region33: #{tpu_custom_call.1} parent=1 // pred_fallthru
      _
    %p52 = scmp.eq.s32.totalorder 0, 0
    // Predicated region
    $region34: #{tpu_custom_call.1} parent=1 // pred_check
      %p53 = pneg %p52
    $region35: #{tpu_custom_call.1} parent=1 // pred_check_branch
      %55 = sbr.rel (%p53) target = $region37
    $region36: #{tpu_custom_call.1} parent=1 // pred_region
      %56 = vst [vmem:[#allocation3] sm:$0xff] 0.0
      %57 = vst [vmem:[#allocation4] sm:$0xff] 0.0
    $region37: #{tpu_custom_call.1} parent=1 // pred_fallthru
      _
    %v58 = vld [vmem:[%s0] sm:$0xff]
    %v59 = vld [vmem:[%s0 + $0x8] sm:$0xff]
    %v60 = vld [vmem:[%s0 + $0x10] sm:$0xff]
    %v61 = vld [vmem:[%s0 + $0x18] sm:$0xff]
    %v62 = vld [vmem:[%s0 + $0x20] sm:$0xff]
    %v63 = vld [vmem:[%s0 + $0x28] sm:$0xff]
    %v64 = vld [vmem:[%s0 + $0x30] sm:$0xff]
    %v65 = vld [vmem:[%s0 + $0x38] sm:$0xff]
    %v66 = vld [vmem:[%s1] sm:$0xf]
    %v67 = vld [vmem:[%s3] sm:$0x1]
    %v69 = vlaneseq
    %v70 = vshrl.u32 %v69, 7
    %v71 = vsub.s32 0, %v70
    %v72 = vrot.slane %v67, %v71
    %vm74 = vcmask 31744
    %v76 = vsel %vm74, %v58, 0
    %v79 = vsel %vm74, %v59, 0
    %v82 = vsel %vm74, %v60, 0
    %v85 = vsel %vm74, %v61, 0
    %v88 = vsel %vm74, %v62, 0
    %v91 = vsel %vm74, %v63, 0
    %v94 = vsel %vm74, %v64, 0
    %v97 = vsel %vm74, %v65, 0
    %vm99 = vcmask 1043456
    %v101 = vsel %vm99, %v66, 0
    %103 = vmatprep.subr.mxu0 0.0
    %104 = vmatpush1.msra.mxu0 %v101
    %105 = vmatprep.subr.mxu0 0.0
    %106 = vmatpush1.msra.mxu0 0.0
    %107 = vmatprep.subr.mxu0 0.0
    %108 = vmatpush1.msra.mxu0 0.0
    %109 = vmatprep.subr.mxu0 0.0
    %110 = vmatpush1.msra.mxu0 0.0
    %111 = vmatprep.subr.mxu0 0.0
    %112 = vmatpush1.msra.mxu0 0.0
    %113 = vmatprep.subr.mxu0 0.0
    %114 = vmatpush1.msra.mxu0 0.0
    %115 = vmatprep.subr.mxu0 0.0
    %116 = vmatpush1.msra.mxu0 0.0
    %117 = vmatprep.subr.mxu0 0.0
    %118 = vmatpush1.msra.mxu0 0.0
    %119 = vmatprep.subr.mxu0 0.0
    %120 = vmatpush1.msra.mxu0 0.0
    %121 = vmatprep.subr.mxu0 0.0
    %122 = vmatpush1.msra.mxu0 0.0
    %123 = vmatprep.subr.mxu0 0.0
    %124 = vmatpush1.msra.mxu0 0.0
    %125 = vmatprep.subr.mxu0 0.0
    %126 = vmatpush1.msra.mxu0 0.0
    %127 = vmatprep.subr.mxu0 0.0
    %128 = vmatpush1.msra.mxu0 0.0
    %129 = vmatprep.subr.mxu0 0.0
    %130 = vmatpush1.msra.mxu0 0.0
    %131 = vmatprep.subr.mxu0 0.0
    %132 = vmatpush1.msra.mxu0 0.0
    %133 = vmatprep.subr.mxu0 0.0
    %134 = vmatpush1.msra.mxu0 0.0
    %135 = vmatprep.subr.mxu0 0.0
    %136 = vmatpush1.msra.mxu0 0.0
    %137 = vmatprep.subr.mxu0 0.0
    %138 = vmatpush1.msra.mxu0 0.0
    %139 = vmatprep.subr.mxu0 0.0
    %140 = vmatpush1.msra.mxu0 0.0
    %141 = vmatprep.subr.mxu0 0.0
    %142 = vmatpush1.msra.mxu0 0.0
    %143 = vmatprep.subr.mxu0 0.0
    %144 = vmatpush1.msra.mxu0 0.0
    %145 = vmatprep.subr.mxu0 0.0
    %146 = vmatpush1.msra.mxu0 0.0
    %147 = vmatprep.subr.mxu0 0.0
    %148 = vmatpush1.msra.mxu0 0.0
    %149 = vmatprep.subr.mxu0 0.0
    %150 = vmatpush1.msra.mxu0 0.0
    %151 = vmatprep.subr.mxu0 0.0
    %152 = vmatpush1.msra.mxu0 0.0
    %153 = vmatprep.subr.mxu0 0.0
    %154 = vmatpush1.msra.mxu0 0.0
    %155 = vmatprep.subr.mxu0 0.0
    %156 = vmatpush1.msra.mxu0 0.0
    %157 = vmatprep.subr.mxu0 0.0
    %158 = vmatpush1.msra.mxu0 0.0
    %159 = vmatprep.subr.mxu0 0.0
    %160 = vmatpush1.msra.mxu0 0.0
    %161 = vmatprep.subr.mxu0 0.0
    %162 = vmatpush1.msra.mxu0 0.0
    %163 = vmatprep.subr.mxu0 0.0
    %164 = vmatpush1.msra.mxu0 0.0
    %165 = vmatprep.subr.mxu0 0.0
    %166 = vmatpush1.msra.mxu0 0.0
    %167 = vmatprep.mubr.f32.mxu0 0.0
    %168 = vmatmul.mubr.f32.gmra.mrb[0].mxu0 %v76
    %v169 = vpop.f32.mrb[0].mxu0
    %v170 = vadd.f32 %v72, %v169
    %v171 = vpop.f32.mrb[0].mxu0
    %172 = vmatprep.mubr.f32.mxu0 0.0
    %173 = vmatmul.mubr.f32.gmra.mrb[0].mxu0 %v79
    %v174 = vpop.f32.mrb[0].mxu0
    %v175 = vadd.f32 %v72, %v174
    %v176 = vpop.f32.mrb[0].mxu0
    %177 = vmatprep.mubr.f32.mxu0 0.0
    %178 = vmatmul.mubr.f32.gmra.mrb[0].mxu0 %v82
    %v179 = vpop.f32.mrb[0].mxu0
    %v180 = vadd.f32 %v72, %v179
    %v181 = vpop.f32.mrb[0].mxu0
    %182 = vmatprep.mubr.f32.mxu0 0.0
    %183 = vmatmul.mubr.f32.gmra.mrb[0].mxu0 %v85
    %v184 = vpop.f32.mrb[0].mxu0
    %v185 = vadd.f32 %v72, %v184
    %v186 = vpop.f32.mrb[0].mxu0
    %187 = vmatprep.mubr.f32.mxu0 0.0
    %188 = vmatmul.mubr.f32.gmra.mrb[0].mxu0 %v88
    %v189 = vpop.f32.mrb[0].mxu0
    %v190 = vadd.f32 %v72, %v189
    %v191 = vpop.f32.mrb[0].mxu0
    %192 = vmatprep.mubr.f32.mxu0 0.0
    %193 = vmatmul.mubr.f32.gmra.mrb[0].mxu0 %v91
    %v194 = vpop.f32.mrb[0].mxu0
    %v195 = vadd.f32 %v72, %v194
    %v196 = vpop.f32.mrb[0].mxu0
    %197 = vmatprep.mubr.f32.mxu0 0.0
    %198 = vmatmul.mubr.f32.gmra.mrb[0].mxu0 %v94
    %v199 = vpop.f32.mrb[0].mxu0
    %v200 = vadd.f32 %v72, %v199
    %v201 = vpop.f32.mrb[0].mxu0
    %202 = vmatprep.mubr.f32.mxu0 0.0
    %203 = vmatmul.mubr.f32.gmra.mrb[0].mxu0 %v97
    %v204 = vpop.f32.mrb[0].mxu0
    %v205 = vadd.f32 %v72, %v204
    %v206 = vpop.f32.mrb[0].mxu0
    %207 = vdwg.mxu0
    %208 = vst [vmem:[#allocation2] sm:$0xff] %v170
    %209 = vst [vmem:[#allocation2 + $0x8] sm:$0xff] %v175
    %210 = vst [vmem:[#allocation2 + $0x10] sm:$0xff] %v180
    %211 = vst [vmem:[#allocation2 + $0x18] sm:$0xff] %v185
    %212 = vst [vmem:[#allocation2 + $0x20] sm:$0xff] %v190
    %213 = vst [vmem:[#allocation2 + $0x28] sm:$0xff] %v195
    %214 = vst [vmem:[#allocation2 + $0x30] sm:$0xff] %v200
    %215 = vst [vmem:[#allocation2 + $0x38] sm:$0xff] %v205
    %v216 = vld [vmem:[#allocation5] sm:$0xff]
    %v217 = vld [vmem:[#allocation5 + $0x8] sm:$0xff]
    %v218 = vld [vmem:[#allocation5 + $0x10] sm:$0xff]
    %v219 = vld [vmem:[#allocation5 + $0x18] sm:$0xff]
    %v220 = vld [vmem:[#allocation5 + $0x20] sm:$0xff]
    %v221 = vld [vmem:[#allocation5 + $0x28] sm:$0xff]
    %v222 = vld [vmem:[#allocation5 + $0x30] sm:$0xff]
    %v223 = vld [vmem:[#allocation5 + $0x38] sm:$0xff]
    %v224 = vld [vmem:[#allocation5 + $0x40] sm:$0xff]
    %v225 = vld [vmem:[#allocation5 + $0x48] sm:$0xff]
    %v226 = vld [vmem:[#allocation5 + $0x50] sm:$0xff]
    %v227 = vld [vmem:[#allocation5 + $0x58] sm:$0xff]
    %v228 = vld [vmem:[#allocation5 + $0x60] sm:$0xff]
    %v229 = vld [vmem:[#allocation5 + $0x68] sm:$0xff]
    %v230 = vld [vmem:[#allocation5 + $0x70] sm:$0xff]
    %v231 = vld [vmem:[#allocation5 + $0x78] sm:$0xff]
    %v232 = vlaneseq
    %v233 = vand.u32 %v232, 127
    %vm234 = vcmp.ge.s32.totalorder %v233, 64
    %vm235 = vcmp.lt.s32.totalorder %v233, 96
    %vm236 = vmand %vm234, %vm235
    %v237 = vld [vmem:[#allocation3] sm:$0xff]
    %v238 = vld [vmem:[#allocation4] sm:$0xff]
    %v239 = vld [vmem:[#allocation2] sm:$0xff]
    %240 = vmatprep.subr.mxu0 0.0
    %241 = vmatpush1.msra.mxu0 %v216
    %242 = vmatprep.subr.mxu0 0.0
    %243 = vmatpush1.msra.mxu0 %v217
    %244 = vmatprep.subr.mxu0 0.0
    %245 = vmatpush1.msra.mxu0 %v218
    %246 = vmatprep.subr.mxu0 0.0
    %247 = vmatpush1.msra.mxu0 %v219
    %248 = vmatprep.subr.mxu0 0.0
    %249 = vmatpush1.msra.mxu0 %v220
    %250 = vmatprep.subr.mxu0 0.0
    %251 = vmatpush1.msra.mxu0 %v221
    %252 = vmatprep.subr.mxu0 0.0
    %253 = vmatpush1.msra.mxu0 %v222
    %254 = vmatprep.subr.mxu0 0.0
    %255 = vmatpush1.msra.mxu0 %v223
    %256 = vmatprep.subr.mxu0 0.0
    %257 = vmatpush1.msra.mxu0 %v224
    %258 = vmatprep.subr.mxu0 0.0
    %259 = vmatpush1.msra.mxu0 %v225
    %260 = vmatprep.subr.mxu0 0.0
    %261 = vmatpush1.msra.mxu0 %v226
    %262 = vmatprep.subr.mxu0 0.0
    %263 = vmatpush1.msra.mxu0 %v227
    %264 = vmatprep.subr.mxu0 0.0
    %265 = vmatpush1.msra.mxu0 %v228
    %266 = vmatprep.subr.mxu0 0.0
    %267 = vmatpush1.msra.mxu0 %v229
    %268 = vmatprep.subr.mxu0 0.0
    %269 = vmatpush1.msra.mxu0 %v230
    %270 = vmatprep.subr.mxu0 0.0
    %271 = vmatpush1.msra.mxu0 %v231
    %272 = vmatprep.subr.mxu0 0.0
    %273 = vmatpush1.msra.mxu0 0.0
    %274 = vmatprep.subr.mxu0 0.0
    %275 = vmatpush1.msra.mxu0 0.0
    %276 = vmatprep.subr.mxu0 0.0
    %277 = vmatpush1.msra.mxu0 0.0
    %278 = vmatprep.subr.mxu0 0.0
    %279 = vmatpush1.msra.mxu0 0.0
    %280 = vmatprep.subr.mxu0 0.0
    %281 = vmatpush1.msra.mxu0 0.0
    %282 = vmatprep.subr.mxu0 0.0
    %283 = vmatpush1.msra.mxu0 0.0
    %284 = vmatprep.subr.mxu0 0.0
    %285 = vmatpush1.msra.mxu0 0.0
    %286 = vmatprep.subr.mxu0 0.0
    %287 = vmatpush1.msra.mxu0 0.0
    %288 = vmatprep.subr.mxu0 0.0
    %289 = vmatpush1.msra.mxu0 0.0
    %290 = vmatprep.subr.mxu0 0.0
    %291 = vmatpush1.msra.mxu0 0.0
    %292 = vmatprep.subr.mxu0 0.0
    %293 = vmatpush1.msra.mxu0 0.0
    %294 = vmatprep.subr.mxu0 0.0
    %295 = vmatpush1.msra.mxu0 0.0
    %296 = vmatprep.subr.mxu0 0.0
    %297 = vmatpush1.msra.mxu0 0.0
    %298 = vmatprep.subr.mxu0 0.0
    %299 = vmatpush1.msra.mxu0 0.0
    %300 = vmatprep.subr.mxu0 0.0
    %301 = vmatpush1.msra.mxu0 0.0
    %302 = vmatprep.subr.mxu0 0.0
    %303 = vmatpush1.msra.mxu0 0.0
    %304 = vmatprep.mubr.f32.mxu0 0.0
    %305 = vmatmul.mubr.f32.gmra.mrb[0].mxu0 %v237
    %v306 = vpop.f32.mrb[0].mxu0
    %v307 = vadd.f32 0.0, %v306
    %v308 = vpop.f32.mrb[0].mxu0
    %309 = vdwg.mxu0
    %v310 = vadd.f32 %v239, %v307
    %v311 = vtanh.pop %v310
    %v312 = vxor.u32 %v310, 2147483648
    %v313 = vmul.f32 %v312, 1.442695
    %v314 = vpow.pop %v313
    %v315 = vadd.f32 %v314, 1.0
    %v316 = vrcp.pop %v315
    %v317 = vmul.f32 1.0, %v316
    %v318 = vsel %vm236, %v311, %v317
    %319 = vrot.lane.b32.xlu0 %v318, 96
    %v320 = vpop.permute.xlu0 %319
    %321 = vrot.lane.b32.xlu0 %v318, 64
    %v322 = vpop.permute.xlu0 %321
    %323 = vrot.lane.b32.xlu0 %v318, 32
    %v324 = vpop.permute.xlu0 %323
    %v325 = vmul.f32 %v320, %v238
    %v326 = vmul.f32 %v318, %v322
    %v327 = vadd.f32 %v325, %v326
    %v328 = vtanh.pop %v327
    %v329 = vmul.f32 %v324, %v328
    %s330 = scalar_lea.vmem [#allocation2], 8
    %v331 = vld [vmem:[%s330] sm:$0xff]
    %332 = vmatprep.subr.mxu0 0.0
    %333 = vmatpush1.msra.mxu0 %v216
    %334 = vmatprep.subr.mxu0 0.0
    %335 = vmatpush1.msra.mxu0 %v217
    %336 = vmatprep.subr.mxu0 0.0
    %337 = vmatpush1.msra.mxu0 %v218
    %338 = vmatprep.subr.mxu0 0.0
    %339 = vmatpush1.msra.mxu0 %v219
    %340 = vmatprep.subr.mxu0 0.0
    %341 = vmatpush1.msra.mxu0 %v220
    %342 = vmatprep.subr.mxu0 0.0
    %343 = vmatpush1.msra.mxu0 %v221
    %344 = vmatprep.subr.mxu0 0.0
    %345 = vmatpush1.msra.mxu0 %v222
    %346 = vmatprep.subr.mxu0 0.0
    %347 = vmatpush1.msra.mxu0 %v223
    %348 = vmatprep.subr.mxu0 0.0
    %349 = vmatpush1.msra.mxu0 %v224
    %350 = vmatprep.subr.mxu0 0.0
    %351 = vmatpush1.msra.mxu0 %v225
    %352 = vmatprep.subr.mxu0 0.0
    %353 = vmatpush1.msra.mxu0 %v226
    %354 = vmatprep.subr.mxu0 0.0
    %355 = vmatpush1.msra.mxu0 %v227
    %356 = vmatprep.subr.mxu0 0.0
    %357 = vmatpush1.msra.mxu0 %v228
    %358 = vmatprep.subr.mxu0 0.0
    %359 = vmatpush1.msra.mxu0 %v229
    %360 = vmatprep.subr.mxu0 0.0
    %361 = vmatpush1.msra.mxu0 %v230
    %362 = vmatprep.subr.mxu0 0.0
    %363 = vmatpush1.msra.mxu0 %v231
    %364 = vmatprep.subr.mxu0 0.0
    %365 = vmatpush1.msra.mxu0 0.0
    %366 = vmatprep.subr.mxu0 0.0
    %367 = vmatpush1.msra.mxu0 0.0
    %368 = vmatprep.subr.mxu0 0.0
    %369 = vmatpush1.msra.mxu0 0.0
    %370 = vmatprep.subr.mxu0 0.0
    %371 = vmatpush1.msra.mxu0 0.0
    %372 = vmatprep.subr.mxu0 0.0
    %373 = vmatpush1.msra.mxu0 0.0
    %374 = vmatprep.subr.mxu0 0.0
    %375 = vmatpush1.msra.mxu0 0.0
    %376 = vmatprep.subr.mxu0 0.0
    %377 = vmatpush1.msra.mxu0 0.0
    %378 = vmatprep.subr.mxu0 0.0
    %379 = vmatpush1.msra.mxu0 0.0
    %380 = vmatprep.subr.mxu0 0.0
    %381 = vmatpush1.msra.mxu0 0.0
    %382 = vmatprep.subr.mxu0 0.0
    %383 = vmatpush1.msra.mxu0 0.0
    %384 = vmatprep.subr.mxu0 0.0
    %385 = vmatpush1.msra.mxu0 0.0
    %386 = vmatprep.subr.mxu0 0.0
    %387 = vmatpush1.msra.mxu0 0.0
    %388 = vmatprep.subr.mxu0 0.0
    %389 = vmatpush1.msra.mxu0 0.0
    %390 = vmatprep.subr.mxu0 0.0
    %391 = vmatpush1.msra.mxu0 0.0
    %392 = vmatprep.subr.mxu0 0.0
    %393 = vmatpush1.msra.mxu0 0.0
    %394 = vmatprep.subr.mxu0 0.0
    %395 = vmatpush1.msra.mxu0 0.0
    %396 = vmatprep.mubr.f32.mxu0 0.0
    %397 = vmatmul.mubr.f32.gmra.mrb[0].mxu0 %v329
    %v398 = vpop.f32.mrb[0].mxu0
    %v399 = vadd.f32 0.0, %v398
    %v400 = vpop.f32.mrb[0].mxu0
    %401 = vdwg.mxu0
    %v402 = vadd.f32 %v331, %v399
    %v403 = vtanh.pop %v402
    %v404 = vxor.u32 %v402, 2147483648
    %v405 = vmul.f32 %v404, 1.442695
    %v406 = vpow.pop %v405
    %v407 = vadd.f32 %v406, 1.0
    %v408 = vrcp.pop %v407
    %v409 = vmul.f32 1.0, %v408
    %v410 = vsel %vm236, %v403, %v409
    %411 = vrot.lane.b32.xlu0 %v410, 96
    %v412 = vpop.permute.xlu0 %411
    %413 = vrot.lane.b32.xlu0 %v410, 64
    %v414 = vpop.permute.xlu0 %413
    %415 = vrot.lane.b32.xlu0 %v410, 32
    %v416 = vpop.permute.xlu0 %415
    %v417 = vmul.f32 %v412, %v327
    %v418 = vmul.f32 %v410, %v414
    %v419 = vadd.f32 %v417, %v418
    %v420 = vtanh.pop %v419
    %v421 = vmul.f32 %v416, %v420
    %s422 = scalar_lea.vmem [#allocation2], 16
    %v423 = vld [vmem:[%s422] sm:$0xff]
    %424 = vmatprep.subr.mxu0 0.0
    %425 = vmatpush1.msra.mxu0 %v216
    %426 = vmatprep.subr.mxu0 0.0
    %427 = vmatpush1.msra.mxu0 %v217
    %428 = vmatprep.subr.mxu0 0.0
    %429 = vmatpush1.msra.mxu0 %v218
    %430 = vmatprep.subr.mxu0 0.0
    %431 = vmatpush1.msra.mxu0 %v219
    %432 = vmatprep.subr.mxu0 0.0
    %433 = vmatpush1.msra.mxu0 %v220
    %434 = vmatprep.subr.mxu0 0.0
    %435 = vmatpush1.msra.mxu0 %v221
    %436 = vmatprep.subr.mxu0 0.0
    %437 = vmatpush1.msra.mxu0 %v222
    %438 = vmatprep.subr.mxu0 0.0
    %439 = vmatpush1.msra.mxu0 %v223
    %440 = vmatprep.subr.mxu0 0.0
    %441 = vmatpush1.msra.mxu0 %v224
    %442 = vmatprep.subr.mxu0 0.0
    %443 = vmatpush1.msra.mxu0 %v225
    %444 = vmatprep.subr.mxu0 0.0
    %445 = vmatpush1.msra.mxu0 %v226
    %446 = vmatprep.subr.mxu0 0.0
    %447 = vmatpush1.msra.mxu0 %v227
    %448 = vmatprep.subr.mxu0 0.0
    %449 = vmatpush1.msra.mxu0 %v228
    %450 = vmatprep.subr.mxu0 0.0
    %451 = vmatpush1.msra.mxu0 %v229
    %452 = vmatprep.subr.mxu0 0.0
    %453 = vmatpush1.msra.mxu0 %v230
    %454 = vmatprep.subr.mxu0 0.0
    %455 = vmatpush1.msra.mxu0 %v231
    %456 = vmatprep.subr.mxu0 0.0
    %457 = vmatpush1.msra.mxu0 0.0
    %458 = vmatprep.subr.mxu0 0.0
    %459 = vmatpush1.msra.mxu0 0.0
    %460 = vmatprep.subr.mxu0 0.0
    %461 = vmatpush1.msra.mxu0 0.0
    %462 = vmatprep.subr.mxu0 0.0
    %463 = vmatpush1.msra.mxu0 0.0
    %464 = vmatprep.subr.mxu0 0.0
    %465 = vmatpush1.msra.mxu0 0.0
    %466 = vmatprep.subr.mxu0 0.0
    %467 = vmatpush1.msra.mxu0 0.0
    %468 = vmatprep.subr.mxu0 0.0
    %469 = vmatpush1.msra.mxu0 0.0
    %470 = vmatprep.subr.mxu0 0.0
    %471 = vmatpush1.msra.mxu0 0.0
    %472 = vmatprep.subr.mxu0 0.0
    %473 = vmatpush1.msra.mxu0 0.0
    %474 = vmatprep.subr.mxu0 0.0
    %475 = vmatpush1.msra.mxu0 0.0
    %476 = vmatprep.subr.mxu0 0.0
    %477 = vmatpush1.msra.mxu0 0.0
    %478 = vmatprep.subr.mxu0 0.0
    %479 = vmatpush1.msra.mxu0 0.0
    %480 = vmatprep.subr.mxu0 0.0
    %481 = vmatpush1.msra.mxu0 0.0
    %482 = vmatprep.subr.mxu0 0.0
    %483 = vmatpush1.msra.mxu0 0.0
    %484 = vmatprep.subr.mxu0 0.0
    %485 = vmatpush1.msra.mxu0 0.0
    %486 = vmatprep.subr.mxu0 0.0
    %487 = vmatpush1.msra.mxu0 0.0
    %488 = vmatprep.mubr.f32.mxu0 0.0
    %489 = vmatmul.mubr.f32.gmra.mrb[0].mxu0 %v421
    %v490 = vpop.f32.mrb[0].mxu0
    %v491 = vadd.f32 0.0, %v490
    %v492 = vpop.f32.mrb[0].mxu0
    %493 = vdwg.mxu0
    %v494 = vadd.f32 %v423, %v491
    %v495 = vtanh.pop %v494
    %v496 = vxor.u32 %v494, 2147483648
    %v497 = vmul.f32 %v496, 1.442695
    %v498 = vpow.pop %v497
    %v499 = vadd.f32 %v498, 1.0
    %v500 = vrcp.pop %v499
    %v501 = vmul.f32 1.0, %v500
    %v502 = vsel %vm236, %v495, %v501
    %503 = vrot.lane.b32.xlu0 %v502, 96
    %v504 = vpop.permute.xlu0 %503
    %505 = vrot.lane.b32.xlu0 %v502, 64
    %v506 = vpop.permute.xlu0 %505
    %507 = vrot.lane.b32.xlu0 %v502, 32
    %v508 = vpop.permute.xlu0 %507
    %v509 = vmul.f32 %v504, %v419
    %v510 = vmul.f32 %v502, %v506
    %v511 = vadd.f32 %v509, %v510
    %v512 = vtanh.pop %v511
    %v513 = vmul.f32 %v508, %v512
    %s514 = scalar_lea.vmem [#allocation2], 24
    %v515 = vld [vmem:[%s514] sm:$0xff]
    %516 = vmatprep.subr.mxu0 0.0
    %517 = vmatpush1.msra.mxu0 %v216
    %518 = vmatprep.subr.mxu0 0.0
    %519 = vmatpush1.msra.mxu0 %v217
    %520 = vmatprep.subr.mxu0 0.0
    %521 = vmatpush1.msra.mxu0 %v218
    %522 = vmatprep.subr.mxu0 0.0
    %523 = vmatpush1.msra.mxu0 %v219
    %524 = vmatprep.subr.mxu0 0.0
    %525 = vmatpush1.msra.mxu0 %v220
    %526 = vmatprep.subr.mxu0 0.0
    %527 = vmatpush1.msra.mxu0 %v221
    %528 = vmatprep.subr.mxu0 0.0
    %529 = vmatpush1.msra.mxu0 %v222
    %530 = vmatprep.subr.mxu0 0.0
    %531 = vmatpush1.msra.mxu0 %v223
    %532 = vmatprep.subr.mxu0 0.0
    %533 = vmatpush1.msra.mxu0 %v224
    %534 = vmatprep.subr.mxu0 0.0
    %535 = vmatpush1.msra.mxu0 %v225
    %536 = vmatprep.subr.mxu0 0.0
    %537 = vmatpush1.msra.mxu0 %v226
    %538 = vmatprep.subr.mxu0 0.0
    %539 = vmatpush1.msra.mxu0 %v227
    %540 = vmatprep.subr.mxu0 0.0
    %541 = vmatpush1.msra.mxu0 %v228
    %542 = vmatprep.subr.mxu0 0.0
    %543 = vmatpush1.msra.mxu0 %v229
    %544 = vmatprep.subr.mxu0 0.0
    %545 = vmatpush1.msra.mxu0 %v230
    %546 = vmatprep.subr.mxu0 0.0
    %547 = vmatpush1.msra.mxu0 %v231
    %548 = vmatprep.subr.mxu0 0.0
    %549 = vmatpush1.msra.mxu0 0.0
    %550 = vmatprep.subr.mxu0 0.0
    %551 = vmatpush1.msra.mxu0 0.0
    %552 = vmatprep.subr.mxu0 0.0
    %553 = vmatpush1.msra.mxu0 0.0
    %554 = vmatprep.subr.mxu0 0.0
    %555 = vmatpush1.msra.mxu0 0.0
    %556 = vmatprep.subr.mxu0 0.0
    %557 = vmatpush1.msra.mxu0 0.0
    %558 = vmatprep.subr.mxu0 0.0
    %559 = vmatpush1.msra.mxu0 0.0
    %560 = vmatprep.subr.mxu0 0.0
    %561 = vmatpush1.msra.mxu0 0.0
    %562 = vmatprep.subr.mxu0 0.0
    %563 = vmatpush1.msra.mxu0 0.0
    %564 = vmatprep.subr.mxu0 0.0
    %565 = vmatpush1.msra.mxu0 0.0
    %566 = vmatprep.subr.mxu0 0.0
    %567 = vmatpush1.msra.mxu0 0.0
    %568 = vmatprep.subr.mxu0 0.0
    %569 = vmatpush1.msra.mxu0 0.0
    %570 = vmatprep.subr.mxu0 0.0
    %571 = vmatpush1.msra.mxu0 0.0
    %572 = vmatprep.subr.mxu0 0.0
    %573 = vmatpush1.msra.mxu0 0.0
    %574 = vmatprep.subr.mxu0 0.0
    %575 = vmatpush1.msra.mxu0 0.0
    %576 = vmatprep.subr.mxu0 0.0
    %577 = vmatpush1.msra.mxu0 0.0
    %578 = vmatprep.subr.mxu0 0.0
    %579 = vmatpush1.msra.mxu0 0.0
    %580 = vmatprep.mubr.f32.mxu0 0.0
    %581 = vmatmul.mubr.f32.gmra.mrb[0].mxu0 %v513
    %v582 = vpop.f32.mrb[0].mxu0
    %v583 = vadd.f32 0.0, %v582
    %v584 = vpop.f32.mrb[0].mxu0
    %585 = vdwg.mxu0
    %v586 = vadd.f32 %v515, %v583
    %v587 = vtanh.pop %v586
    %v588 = vxor.u32 %v586, 2147483648
    %v589 = vmul.f32 %v588, 1.442695
    %v590 = vpow.pop %v589
    %v591 = vadd.f32 %v590, 1.0
    %v592 = vrcp.pop %v591
    %v593 = vmul.f32 1.0, %v592
    %v594 = vsel %vm236, %v587, %v593
    %595 = vrot.lane.b32.xlu0 %v594, 96
    %v596 = vpop.permute.xlu0 %595
    %597 = vrot.lane.b32.xlu0 %v594, 64
    %v598 = vpop.permute.xlu0 %597
    %599 = vrot.lane.b32.xlu0 %v594, 32
    %v600 = vpop.permute.xlu0 %599
    %v601 = vmul.f32 %v596, %v511
    %v602 = vmul.f32 %v594, %v598
    %v603 = vadd.f32 %v601, %v602
    %v604 = vtanh.pop %v603
    %v605 = vmul.f32 %v600, %v604
    %s606 = scalar_lea.vmem [#allocation2], 32
    %v607 = vld [vmem:[%s606] sm:$0xff]
    %608 = vmatprep.subr.mxu0 0.0
    %609 = vmatpush1.msra.mxu0 %v216
    %610 = vmatprep.subr.mxu0 0.0
    %611 = vmatpush1.msra.mxu0 %v217
    %612 = vmatprep.subr.mxu0 0.0
    %613 = vmatpush1.msra.mxu0 %v218
    %614 = vmatprep.subr.mxu0 0.0
    %615 = vmatpush1.msra.mxu0 %v219
    %616 = vmatprep.subr.mxu0 0.0
    %617 = vmatpush1.msra.mxu0 %v220
    %618 = vmatprep.subr.mxu0 0.0
    %619 = vmatpush1.msra.mxu0 %v221
    %620 = vmatprep.subr.mxu0 0.0
    %621 = vmatpush1.msra.mxu0 %v222
    %622 = vmatprep.subr.mxu0 0.0
    %623 = vmatpush1.msra.mxu0 %v223
    %624 = vmatprep.subr.mxu0 0.0
    %625 = vmatpush1.msra.mxu0 %v224
    %626 = vmatprep.subr.mxu0 0.0
    %627 = vmatpush1.msra.mxu0 %v225
    %628 = vmatprep.subr.mxu0 0.0
    %629 = vmatpush1.msra.mxu0 %v226
    %630 = vmatprep.subr.mxu0 0.0
    %631 = vmatpush1.msra.mxu0 %v227
    %632 = vmatprep.subr.mxu0 0.0
    %633 = vmatpush1.msra.mxu0 %v228
    %634 = vmatprep.subr.mxu0 0.0
    %635 = vmatpush1.msra.mxu0 %v229
    %636 = vmatprep.subr.mxu0 0.0
    %637 = vmatpush1.msra.mxu0 %v230
    %638 = vmatprep.subr.mxu0 0.0
    %639 = vmatpush1.msra.mxu0 %v231
    %640 = vmatprep.subr.mxu0 0.0
    %641 = vmatpush1.msra.mxu0 0.0
    %642 = vmatprep.subr.mxu0 0.0
    %643 = vmatpush1.msra.mxu0 0.0
    %644 = vmatprep.subr.mxu0 0.0
    %645 = vmatpush1.msra.mxu0 0.0
    %646 = vmatprep.subr.mxu0 0.0
    %647 = vmatpush1.msra.mxu0 0.0
    %648 = vmatprep.subr.mxu0 0.0
    %649 = vmatpush1.msra.mxu0 0.0
    %650 = vmatprep.subr.mxu0 0.0
    %651 = vmatpush1.msra.mxu0 0.0
    %652 = vmatprep.subr.mxu0 0.0
    %653 = vmatpush1.msra.mxu0 0.0
    %654 = vmatprep.subr.mxu0 0.0
    %655 = vmatpush1.msra.mxu0 0.0
    %656 = vmatprep.subr.mxu0 0.0
    %657 = vmatpush1.msra.mxu0 0.0
    %658 = vmatprep.subr.mxu0 0.0
    %659 = vmatpush1.msra.mxu0 0.0
    %660 = vmatprep.subr.mxu0 0.0
    %661 = vmatpush1.msra.mxu0 0.0
    %662 = vmatprep.subr.mxu0 0.0
    %663 = vmatpush1.msra.mxu0 0.0
    %664 = vmatprep.subr.mxu0 0.0
    %665 = vmatpush1.msra.mxu0 0.0
    %666 = vmatprep.subr.mxu0 0.0
    %667 = vmatpush1.msra.mxu0 0.0
    %668 = vmatprep.subr.mxu0 0.0
    %669 = vmatpush1.msra.mxu0 0.0
    %670 = vmatprep.subr.mxu0 0.0
    %671 = vmatpush1.msra.mxu0 0.0
    %672 = vmatprep.mubr.f32.mxu0 0.0
    %673 = vmatmul.mubr.f32.gmra.mrb[0].mxu0 %v605
    %v674 = vpop.f32.mrb[0].mxu0
    %v675 = vadd.f32 0.0, %v674
    %v676 = vpop.f32.mrb[0].mxu0
    %677 = vdwg.mxu0
    %v678 = vadd.f32 %v607, %v675
    %v679 = vtanh.pop %v678
    %v680 = vxor.u32 %v678, 2147483648
    %v681 = vmul.f32 %v680, 1.442695
    %v682 = vpow.pop %v681
    %v683 = vadd.f32 %v682, 1.0
    %v684 = vrcp.pop %v683
    %v685 = vmul.f32 1.0, %v684
    %v686 = vsel %vm236, %v679, %v685
    %687 = vrot.lane.b32.xlu0 %v686, 96
    %v688 = vpop.permute.xlu0 %687
    %689 = vrot.lane.b32.xlu0 %v686, 64
    %v690 = vpop.permute.xlu0 %689
    %691 = vrot.lane.b32.xlu0 %v686, 32
    %v692 = vpop.permute.xlu0 %691
    %v693 = vmul.f32 %v688, %v603
    %v694 = vmul.f32 %v686, %v690
    %v695 = vadd.f32 %v693, %v694
    %v696 = vtanh.pop %v695
    %v697 = vmul.f32 %v692, %v696
    %s698 = scalar_lea.vmem [#allocation2], 40
    %v699 = vld [vmem:[%s698] sm:$0xff]
    %700 = vmatprep.subr.mxu0 0.0
    %701 = vmatpush1.msra.mxu0 %v216
    %702 = vmatprep.subr.mxu0 0.0
    %703 = vmatpush1.msra.mxu0 %v217
    %704 = vmatprep.subr.mxu0 0.0
    %705 = vmatpush1.msra.mxu0 %v218
    %706 = vmatprep.subr.mxu0 0.0
    %707 = vmatpush1.msra.mxu0 %v219
    %708 = vmatprep.subr.mxu0 0.0
    %709 = vmatpush1.msra.mxu0 %v220
    %710 = vmatprep.subr.mxu0 0.0
    %711 = vmatpush1.msra.mxu0 %v221
    %712 = vmatprep.subr.mxu0 0.0
    %713 = vmatpush1.msra.mxu0 %v222
    %714 = vmatprep.subr.mxu0 0.0
    %715 = vmatpush1.msra.mxu0 %v223
    %716 = vmatprep.subr.mxu0 0.0
    %717 = vmatpush1.msra.mxu0 %v224
    %718 = vmatprep.subr.mxu0 0.0
    %719 = vmatpush1.msra.mxu0 %v225
    %720 = vmatprep.subr.mxu0 0.0
    %721 = vmatpush1.msra.mxu0 %v226
    %722 = vmatprep.subr.mxu0 0.0
    %723 = vmatpush1.msra.mxu0 %v227
    %724 = vmatprep.subr.mxu0 0.0
    %725 = vmatpush1.msra.mxu0 %v228
    %726 = vmatprep.subr.mxu0 0.0
    %727 = vmatpush1.msra.mxu0 %v229
    %728 = vmatprep.subr.mxu0 0.0
    %729 = vmatpush1.msra.mxu0 %v230
    %730 = vmatprep.subr.mxu0 0.0
    %731 = vmatpush1.msra.mxu0 %v231
    %732 = vmatprep.subr.mxu0 0.0
    %733 = vmatpush1.msra.mxu0 0.0
    %734 = vmatprep.subr.mxu0 0.0
    %735 = vmatpush1.msra.mxu0 0.0
    %736 = vmatprep.subr.mxu0 0.0
    %737 = vmatpush1.msra.mxu0 0.0
    %738 = vmatprep.subr.mxu0 0.0
    %739 = vmatpush1.msra.mxu0 0.0
    %740 = vmatprep.subr.mxu0 0.0
    %741 = vmatpush1.msra.mxu0 0.0
    %742 = vmatprep.subr.mxu0 0.0
    %743 = vmatpush1.msra.mxu0 0.0
    %744 = vmatprep.subr.mxu0 0.0
    %745 = vmatpush1.msra.mxu0 0.0
    %746 = vmatprep.subr.mxu0 0.0
    %747 = vmatpush1.msra.mxu0 0.0
    %748 = vmatprep.subr.mxu0 0.0
    %749 = vmatpush1.msra.mxu0 0.0
    %750 = vmatprep.subr.mxu0 0.0
    %751 = vmatpush1.msra.mxu0 0.0
    %752 = vmatprep.subr.mxu0 0.0
    %753 = vmatpush1.msra.mxu0 0.0
    %754 = vmatprep.subr.mxu0 0.0
    %755 = vmatpush1.msra.mxu0 0.0
    %756 = vmatprep.subr.mxu0 0.0
    %757 = vmatpush1.msra.mxu0 0.0
    %758 = vmatprep.subr.mxu0 0.0
    %759 = vmatpush1.msra.mxu0 0.0
    %760 = vmatprep.subr.mxu0 0.0
    %761 = vmatpush1.msra.mxu0 0.0
    %762 = vmatprep.subr.mxu0 0.0
    %763 = vmatpush1.msra.mxu0 0.0
    %764 = vmatprep.mubr.f32.mxu0 0.0
    %765 = vmatmul.mubr.f32.gmra.mrb[0].mxu0 %v697
    %v766 = vpop.f32.mrb[0].mxu0
    %v767 = vadd.f32 0.0, %v766
    %v768 = vpop.f32.mrb[0].mxu0
    %769 = vdwg.mxu0
    %v770 = vadd.f32 %v699, %v767
    %v771 = vtanh.pop %v770
    %v772 = vxor.u32 %v770, 2147483648
    %v773 = vmul.f32 %v772, 1.442695
    %v774 = vpow.pop %v773
    %v775 = vadd.f32 %v774, 1.0
    %v776 = vrcp.pop %v775
    %v777 = vmul.f32 1.0, %v776
    %v778 = vsel %vm236, %v771, %v777
    %779 = vrot.lane.b32.xlu0 %v778, 96
    %v780 = vpop.permute.xlu0 %779
    %781 = vrot.lane.b32.xlu0 %v778, 64
    %v782 = vpop.permute.xlu0 %781
    %783 = vrot.lane.b32.xlu0 %v778, 32
    %v784 = vpop.permute.xlu0 %783
    %v785 = vmul.f32 %v780, %v695
    %v786 = vmul.f32 %v778, %v782
    %v787 = vadd.f32 %v785, %v786
    %v788 = vtanh.pop %v787
    %v789 = vmul.f32 %v784, %v788
    %s790 = scalar_lea.vmem [#allocation2], 48
    %v791 = vld [vmem:[%s790] sm:$0xff]
    %792 = vmatprep.subr.mxu0 0.0
    %793 = vmatpush1.msra.mxu0 %v216
    %794 = vmatprep.subr.mxu0 0.0
    %795 = vmatpush1.msra.mxu0 %v217
    %796 = vmatprep.subr.mxu0 0.0
    %797 = vmatpush1.msra.mxu0 %v218
    %798 = vmatprep.subr.mxu0 0.0
    %799 = vmatpush1.msra.mxu0 %v219
    %800 = vmatprep.subr.mxu0 0.0
    %801 = vmatpush1.msra.mxu0 %v220
    %802 = vmatprep.subr.mxu0 0.0
    %803 = vmatpush1.msra.mxu0 %v221
    %804 = vmatprep.subr.mxu0 0.0
    %805 = vmatpush1.msra.mxu0 %v222
    %806 = vmatprep.subr.mxu0 0.0
    %807 = vmatpush1.msra.mxu0 %v223
    %808 = vmatprep.subr.mxu0 0.0
    %809 = vmatpush1.msra.mxu0 %v224
    %810 = vmatprep.subr.mxu0 0.0
    %811 = vmatpush1.msra.mxu0 %v225
    %812 = vmatprep.subr.mxu0 0.0
    %813 = vmatpush1.msra.mxu0 %v226
    %814 = vmatprep.subr.mxu0 0.0
    %815 = vmatpush1.msra.mxu0 %v227
    %816 = vmatprep.subr.mxu0 0.0
    %817 = vmatpush1.msra.mxu0 %v228
    %818 = vmatprep.subr.mxu0 0.0
    %819 = vmatpush1.msra.mxu0 %v229
    %820 = vmatprep.subr.mxu0 0.0
    %821 = vmatpush1.msra.mxu0 %v230
    %822 = vmatprep.subr.mxu0 0.0
    %823 = vmatpush1.msra.mxu0 %v231
    %824 = vmatprep.subr.mxu0 0.0
    %825 = vmatpush1.msra.mxu0 0.0
    %826 = vmatprep.subr.mxu0 0.0
    %827 = vmatpush1.msra.mxu0 0.0
    %828 = vmatprep.subr.mxu0 0.0
    %829 = vmatpush1.msra.mxu0 0.0
    %830 = vmatprep.subr.mxu0 0.0
    %831 = vmatpush1.msra.mxu0 0.0
    %832 = vmatprep.subr.mxu0 0.0
    %833 = vmatpush1.msra.mxu0 0.0
    %834 = vmatprep.subr.mxu0 0.0
    %835 = vmatpush1.msra.mxu0 0.0
    %836 = vmatprep.subr.mxu0 0.0
    %837 = vmatpush1.msra.mxu0 0.0
    %838 = vmatprep.subr.mxu0 0.0
    %839 = vmatpush1.msra.mxu0 0.0
    %840 = vmatprep.subr.mxu0 0.0
    %841 = vmatpush1.msra.mxu0 0.0
    %842 = vmatprep.subr.mxu0 0.0
    %843 = vmatpush1.msra.mxu0 0.0
    %844 = vmatprep.subr.mxu0 0.0
    %845 = vmatpush1.msra.mxu0 0.0
    %846 = vmatprep.subr.mxu0 0.0
    %847 = vmatpush1.msra.mxu0 0.0
    %848 = vmatprep.subr.mxu0 0.0
    %849 = vmatpush1.msra.mxu0 0.0
    %850 = vmatprep.subr.mxu0 0.0
    %851 = vmatpush1.msra.mxu0 0.0
    %852 = vmatprep.subr.mxu0 0.0
    %853 = vmatpush1.msra.mxu0 0.0
    %854 = vmatprep.subr.mxu0 0.0
    %855 = vmatpush1.msra.mxu0 0.0
    %856 = vmatprep.mubr.f32.mxu0 0.0
    %857 = vmatmul.mubr.f32.gmra.mrb[0].mxu0 %v789
    %v858 = vpop.f32.mrb[0].mxu0
    %v859 = vadd.f32 0.0, %v858
    %v860 = vpop.f32.mrb[0].mxu0
    %861 = vdwg.mxu0
    %v862 = vadd.f32 %v791, %v859
    %v863 = vtanh.pop %v862
    %v864 = vxor.u32 %v862, 2147483648
    %v865 = vmul.f32 %v864, 1.442695
    %v866 = vpow.pop %v865
    %v867 = vadd.f32 %v866, 1.0
    %v868 = vrcp.pop %v867
    %v869 = vmul.f32 1.0, %v868
    %v870 = vsel %vm236, %v863, %v869
    %871 = vrot.lane.b32.xlu0 %v870, 96
    %v872 = vpop.permute.xlu0 %871
    %873 = vrot.lane.b32.xlu0 %v870, 64
    %v874 = vpop.permute.xlu0 %873
    %875 = vrot.lane.b32.xlu0 %v870, 32
    %v876 = vpop.permute.xlu0 %875
    %v877 = vmul.f32 %v872, %v787
    %v878 = vmul.f32 %v870, %v874
    %v879 = vadd.f32 %v877, %v878
    %v880 = vtanh.pop %v879
    %v881 = vmul.f32 %v876, %v880
    %s882 = scalar_lea.vmem [#allocation2], 56
    %v883 = vld [vmem:[%s882] sm:$0xff]
    %884 = vmatprep.subr.mxu0 0.0
    %885 = vmatpush1.msra.mxu0 %v216
    %886 = vmatprep.subr.mxu0 0.0
    %887 = vmatpush1.msra.mxu0 %v217
    %888 = vmatprep.subr.mxu0 0.0
    %889 = vmatpush1.msra.mxu0 %v218
    %890 = vmatprep.subr.mxu0 0.0
    %891 = vmatpush1.msra.mxu0 %v219
    %892 = vmatprep.subr.mxu0 0.0
    %893 = vmatpush1.msra.mxu0 %v220
    %894 = vmatprep.subr.mxu0 0.0
    %895 = vmatpush1.msra.mxu0 %v221
    %896 = vmatprep.subr.mxu0 0.0
    %897 = vmatpush1.msra.mxu0 %v222
    %898 = vmatprep.subr.mxu0 0.0
    %899 = vmatpush1.msra.mxu0 %v223
    %900 = vmatprep.subr.mxu0 0.0
    %901 = vmatpush1.msra.mxu0 %v224
    %902 = vmatprep.subr.mxu0 0.0
    %903 = vmatpush1.msra.mxu0 %v225
    %904 = vmatprep.subr.mxu0 0.0
    %905 = vmatpush1.msra.mxu0 %v226
    %906 = vmatprep.subr.mxu0 0.0
    %907 = vmatpush1.msra.mxu0 %v227
    %908 = vmatprep.subr.mxu0 0.0
    %909 = vmatpush1.msra.mxu0 %v228
    %910 = vmatprep.subr.mxu0 0.0
    %911 = vmatpush1.msra.mxu0 %v229
    %912 = vmatprep.subr.mxu0 0.0
    %913 = vmatpush1.msra.mxu0 %v230
    %914 = vmatprep.subr.mxu0 0.0
    %915 = vmatpush1.msra.mxu0 %v231
    %916 = vmatprep.subr.mxu0 0.0
    %917 = vmatpush1.msra.mxu0 0.0
    %918 = vmatprep.subr.mxu0 0.0
    %919 = vmatpush1.msra.mxu0 0.0
    %920 = vmatprep.subr.mxu0 0.0
    %921 = vmatpush1.msra.mxu0 0.0
    %922 = vmatprep.subr.mxu0 0.0
    %923 = vmatpush1.msra.mxu0 0.0
    %924 = vmatprep.subr.mxu0 0.0
    %925 = vmatpush1.msra.mxu0 0.0
    %926 = vmatprep.subr.mxu0 0.0
    %927 = vmatpush1.msra.mxu0 0.0
    %928 = vmatprep.subr.mxu0 0.0
    %929 = vmatpush1.msra.mxu0 0.0
    %930 = vmatprep.subr.mxu0 0.0
    %931 = vmatpush1.msra.mxu0 0.0
    %932 = vmatprep.subr.mxu0 0.0
    %933 = vmatpush1.msra.mxu0 0.0
    %934 = vmatprep.subr.mxu0 0.0
    %935 = vmatpush1.msra.mxu0 0.0
    %936 = vmatprep.subr.mxu0 0.0
    %937 = vmatpush1.msra.mxu0 0.0
    %938 = vmatprep.subr.mxu0 0.0
    %939 = vmatpush1.msra.mxu0 0.0
    %940 = vmatprep.subr.mxu0 0.0
    %941 = vmatpush1.msra.mxu0 0.0
    %942 = vmatprep.subr.mxu0 0.0
    %943 = vmatpush1.msra.mxu0 0.0
    %944 = vmatprep.subr.mxu0 0.0
    %945 = vmatpush1.msra.mxu0 0.0
    %946 = vmatprep.subr.mxu0 0.0
    %947 = vmatpush1.msra.mxu0 0.0
    %948 = vmatprep.mubr.f32.mxu0 0.0
    %949 = vmatmul.mubr.f32.gmra.mrb[0].mxu0 %v881
    %v950 = vpop.f32.mrb[0].mxu0
    %v951 = vadd.f32 0.0, %v950
    %v952 = vpop.f32.mrb[0].mxu0
    %953 = vdwg.mxu0
    %v954 = vadd.f32 %v883, %v951
    %v955 = vtanh.pop %v954
    %v956 = vxor.u32 %v954, 2147483648
    %v957 = vmul.f32 %v956, 1.442695
    %v958 = vpow.pop %v957
    %v959 = vadd.f32 %v958, 1.0
    %v960 = vrcp.pop %v959
    %v961 = vmul.f32 1.0, %v960
    %v962 = vsel %vm236, %v955, %v961
    %963 = vrot.lane.b32.xlu0 %v962, 96
    %v964 = vpop.permute.xlu0 %963
    %965 = vrot.lane.b32.xlu0 %v962, 64
    %v966 = vpop.permute.xlu0 %965
    %967 = vrot.lane.b32.xlu0 %v962, 32
    %v968 = vpop.permute.xlu0 %967
    %v969 = vmul.f32 %v964, %v879
    %v970 = vmul.f32 %v962, %v966
    %v971 = vadd.f32 %v969, %v970
    %v972 = vtanh.pop %v971
    %v973 = vmul.f32 %v968, %v972
    %974 = vst [vmem:[#allocation3] sm:$0xff] %v973
    %975 = vst [vmem:[#allocation4] sm:$0xff] %v971
    // Predicated region
    $region38: #{tpu_custom_call.1} parent=1 // pred_check
      %p976 = pneg %p52
    $region39: #{tpu_custom_call.1} parent=1 // pred_check_branch
      %978 = sbr.rel (%p976) target = $region41
    $region40: #{tpu_custom_call.1} parent=1 // pred_region
      %v979 = vld [vmem:[#allocation8] sm:$0xff]
      %v980 = vld [vmem:[#allocation8 + $0x8] sm:$0xff]
      %v981 = vld [vmem:[#allocation8 + $0x10] sm:$0xff]
      %v982 = vld [vmem:[#allocation8 + $0x18] sm:$0xff]
      %v983 = vld [vmem:[#allocation8 + $0x20] sm:$0xff]
      %v984 = vld [vmem:[#allocation8 + $0x28] sm:$0xff]
      %v985 = vld [vmem:[#allocation8 + $0x30] sm:$0xff]
      %v986 = vld [vmem:[#allocation8 + $0x38] sm:$0xff]
      %v987 = vld [vmem:[#allocation8 + $0x40] sm:$0xff]
      %v988 = vld [vmem:[#allocation8 + $0x48] sm:$0xff]
      %v989 = vld [vmem:[#allocation8 + $0x50] sm:$0xff]
      %v990 = vld [vmem:[#allocation8 + $0x58] sm:$0xff]
      %v991 = vld [vmem:[#allocation8 + $0x60] sm:$0xff]
      %v992 = vld [vmem:[#allocation8 + $0x68] sm:$0xff]
      %v993 = vld [vmem:[#allocation8 + $0x70] sm:$0xff]
      %v994 = vld [vmem:[#allocation8 + $0x78] sm:$0xff]
      %v995 = vld [vmem:[%s5] sm:$0x1]
      %v997 = vlaneseq
      %v998 = vshrl.u32 %v997, 7
      %v999 = vsub.s32 0, %v998
      %v1000 = vrot.slane %v995, %v999
      %1002 = vmatprep.subr.mxu0 0.0
      %1003 = vmatpush1.msra.mxu0 %v979
      %1004 = vmatprep.subr.mxu0 0.0
      %1005 = vmatpush1.msra.mxu0 %v980
      %1006 = vmatprep.subr.mxu0 0.0
      %1007 = vmatpush1.msra.mxu0 %v981
      %1008 = vmatprep.subr.mxu0 0.0
      %1009 = vmatpush1.msra.mxu0 %v982
      %1010 = vmatprep.subr.mxu0 0.0
      %1011 = vmatpush1.msra.mxu0 %v983
      %1012 = vmatprep.subr.mxu0 0.0
      %1013 = vmatpush1.msra.mxu0 %v984
      %1014 = vmatprep.subr.mxu0 0.0
      %1015 = vmatpush1.msra.mxu0 %v985
      %1016 = vmatprep.subr.mxu0 0.0
      %1017 = vmatpush1.msra.mxu0 %v986
      %1018 = vmatprep.subr.mxu0 0.0
      %1019 = vmatpush1.msra.mxu0 %v987
      %1020 = vmatprep.subr.mxu0 0.0
      %1021 = vmatpush1.msra.mxu0 %v988
      %1022 = vmatprep.subr.mxu0 0.0
      %1023 = vmatpush1.msra.mxu0 %v989
      %1024 = vmatprep.subr.mxu0 0.0
      %1025 = vmatpush1.msra.mxu0 %v990
      %1026 = vmatprep.subr.mxu0 0.0
      %1027 = vmatpush1.msra.mxu0 %v991
      %1028 = vmatprep.subr.mxu0 0.0
      %1029 = vmatpush1.msra.mxu0 %v992
      %1030 = vmatprep.subr.mxu0 0.0
      %1031 = vmatpush1.msra.mxu0 %v993
      %1032 = vmatprep.subr.mxu0 0.0
      %1033 = vmatpush1.msra.mxu0 %v994
      %1034 = vmatprep.subr.mxu0 0.0
      %1035 = vmatpush1.msra.mxu0 0.0
      %1036 = vmatprep.subr.mxu0 0.0
      %1037 = vmatpush1.msra.mxu0 0.0
      %1038 = vmatprep.subr.mxu0 0.0
      %1039 = vmatpush1.msra.mxu0 0.0
      %1040 = vmatprep.subr.mxu0 0.0
      %1041 = vmatpush1.msra.mxu0 0.0
      %1042 = vmatprep.subr.mxu0 0.0
      %1043 = vmatpush1.msra.mxu0 0.0
      %1044 = vmatprep.subr.mxu0 0.0
      %1045 = vmatpush1.msra.mxu0 0.0
      %1046 = vmatprep.subr.mxu0 0.0
      %1047 = vmatpush1.msra.mxu0 0.0
      %1048 = vmatprep.subr.mxu0 0.0
      %1049 = vmatpush1.msra.mxu0 0.0
      %1050 = vmatprep.subr.mxu0 0.0
      %1051 = vmatpush1.msra.mxu0 0.0
      %1052 = vmatprep.subr.mxu0 0.0
      %1053 = vmatpush1.msra.mxu0 0.0
      %1054 = vmatprep.subr.mxu0 0.0
      %1055 = vmatpush1.msra.mxu0 0.0
      %1056 = vmatprep.subr.mxu0 0.0
      %1057 = vmatpush1.msra.mxu0 0.0
      %1058 = vmatprep.subr.mxu0 0.0
      %1059 = vmatpush1.msra.mxu0 0.0
      %1060 = vmatprep.subr.mxu0 0.0
      %1061 = vmatpush1.msra.mxu0 0.0
      %1062 = vmatprep.subr.mxu0 0.0
      %1063 = vmatpush1.msra.mxu0 0.0
      %1064 = vmatprep.subr.mxu0 0.0
      %1065 = vmatpush1.msra.mxu0 0.0
      %1066 = vmatprep.mubr.f32.mxu0 0.0
      %1067 = vmatmul.mubr.f32.gmra.mrb[0].mxu0 %v973
      %v1068 = vpop.f32.mrb[0].mxu0
      %v1069 = vadd.f32 %v1000, %v1068
      %v1070 = vpop.f32.mrb[0].mxu0
      %1071 = vdwg.mxu0
      %1072 = vst [vmem:[#allocation10] sm:$0xff] %v1069
    $region41: #{tpu_custom_call.1} parent=1 // pred_fallthru
      _
    // Predicated region
    $region42: #{tpu_custom_call.1} parent=1 // pred_check
      _
    $region43: #{tpu_custom_call.1} parent=1 // pred_check_branch
      %1074 = sbr.rel (0) target = $region45
    $region44: #{tpu_custom_call.1} parent=1 // pred_region
      %s1076 = ssub.s32 128, 128
      %1077 = vsyncadd [#allocation7], %s1076
      %s1079 = sshll.u32 [#allocation10], 4
      %s1080 = int_to_ptr.vmem [resolvable:$true] %s1079
      %1082 = dma.vmem_to_hbm [thread:$0]  %s1080, 128, %s6, [#allocation7]
    $region45: #{tpu_custom_call.1} parent=1 // pred_fallthru
      _
    // Predicated region
    $region46: #{tpu_custom_call.1} parent=1 // pred_check
      _
    $region47: #{tpu_custom_call.1} parent=1 // pred_check_branch
      %1084 = sbr.rel (0) target = $region49
    $region48: #{tpu_custom_call.1} parent=1 // pred_region
      %1085 = dma.done [#allocation7], 128
    $region49: #{tpu_custom_call.1} parent=1 // pred_fallthru
      _
    %1086 = vsyncpa [#allocation6], 1
    %1087 = vsyncpa [#allocation9], 1
    %1088 = vsyncpa [#allocation7], 1

</llo_original>
